<compile_context>
chip_gen: v7x
topology: tpu7x:2x2x1
jax: 0.10.0
libtpu: 0.0.40
codegen_flags: <defaults>
</compile_context>

<pallas_src>
import functools

import numpy as np
import jax
import jax.numpy as jnp
from jax.experimental import pallas as pl
from jax.experimental.pallas import tpu as pltpu


def _round_up(n, m):
    return (n + m - 1) // m * m


def _pos_enc_kernel(x_ref, w_ref, phases_ref, out_ref, *, d_in, include_input):
    # x_ref:      (TB, d_in)        f32   batch tile
    # w_ref:      (d_in, 2F*d_in)   f32   scattered-frequency matrix (grid-resident)
    # phases_ref: (1, 2F*d_in)      f32   [0, pi/2, 0, pi/2, ...] per channel (resident)
    # out_ref:    (TB, d_out)       f32
    x = x_ref[...]
    # One small MXU matmul replaces the 12-way lane replication + per-lane freq scale:
    #   proj[b, j*d_in + c] == x[b, c] * freq_ri[j]   (exact: one nonzero per column).
    proj = jnp.dot(
        x, w_ref[...],
        precision=jax.lax.Precision.HIGHEST,
        preferred_element_type=jnp.float32,
    )
    embed = jnp.sin(proj + phases_ref[...])
    if include_input:
        out_ref[:, :d_in] = x
        out_ref[:, d_in:] = embed
    else:
        out_ref[...] = embed


def positional_encoding(x, *, num_freqs=6, freq_factor=np.pi, include_input=True,
                        block_rows=2048):
    """Pallas equivalent of PositionalEncoding.forward.  x: (batch, d_in) float32."""
    B, d_in = x.shape
    x = x.astype(jnp.float32)

    d_embed = 2 * num_freqs * d_in
    d_out = d_embed + (d_in if include_input else 0)

    # Buffers exactly as in __init__ (host-side numpy -> trace-time constants).
    freqs = (freq_factor * 2.0 ** np.arange(num_freqs)).astype(np.float32)   # (F,)
    freqs_ri = np.repeat(freqs, 2)                                           # (2F,) [f0,f0,f1,f1,...]
    phases = np.zeros(2 * num_freqs, np.float32)
    phases[1::2] = np.float32(np.pi * 0.5)

    # W[c, j*d_in + c] = freq_ri[j]  reproduces the PyTorch (B, 2F, d_in) -> (B, 2F*d_in)
    # row-major flatten (freq-major, channel-minor).
    cols = np.arange(d_embed)
    W = np.zeros((d_in, d_embed), np.float32)
    W[cols % d_in, cols] = np.repeat(freqs_ri, d_in)
    phases_flat = np.repeat(phases, d_in)[None, :]                           # (1, 2F*d_in)

    # Batch tiling: big row tiles, multiple of 8 sublanes; pad ragged batch, slice after.
    tb = _round_up(min(block_rows, _round_up(B, 8)), 8)
    b_padded = _round_up(B, tb)
    x_p = jnp.pad(x, ((0, b_padded - B), (0, 0))) if b_padded != B else x
    grid = (b_padded // tb,)

    kernel = functools.partial(_pos_enc_kernel, d_in=d_in, include_input=include_input)

    out = pl.pallas_call(
        kernel,
        out_shape=jax.ShapeDtypeStruct((b_padded, d_out), jnp.float32),
        grid_spec=pltpu.PrefetchScalarGridSpec(
            num_scalar_prefetch=0,
            grid=grid,
            in_specs=[
                pl.BlockSpec((tb, d_in), lambda i: (i, 0)),       # x batch tile
                pl.BlockSpec((d_in, d_embed), lambda i: (0, 0)),  # W, stays resident
                pl.BlockSpec((1, d_embed), lambda i: (0, 0)),     # phases, stays resident
            ],
            out_specs=pl.BlockSpec((tb, d_out), lambda i: (i, 0)),
        ),
        compiler_params=pltpu.CompilerParams(
            dimension_semantics=("parallel",),   # shards batch grid across TCs on v7x
        ),
    )(x_p, jnp.asarray(W), jnp.asarray(phases_flat))

    return out[:B] if b_padded != B else out


def _reference(x, *, num_freqs=6, freq_factor=np.pi, include_input=True):
    """Pure-JAX reference reproducing the PyTorch forward."""
    B, d_in = x.shape
    freqs = freq_factor * (2.0 ** jnp.arange(num_freqs, dtype=jnp.float32))
    freqs_ri = jnp.repeat(freqs, 2).reshape(1, -1, 1)                     # (1, 2F, 1)
    phases = jnp.zeros((2 * num_freqs,), jnp.float32).at[1::2].set(np.pi * 0.5)
    phases = phases.reshape(1, -1, 1)                                     # (1, 2F, 1)
    embed = jnp.tile(x[:, None, :], (1, 2 * num_freqs, 1))                # (B, 2F, d_in)
    embed = jnp.sin(phases + embed * freqs_ri)
    embed = embed.reshape(B, -1)
    if include_input:
        embed = jnp.concatenate([x, embed], axis=-1)
    return embed


if __name__ == "__main__":
    key = jax.random.PRNGKey(0)
    batch, d_in, num_freqs = 300, 3, 6   # ragged batch -> exercises padding + multi-step grid
    x = jax.random.normal(key, (batch, d_in), dtype=jnp.float32)

    # jit the wrapper so the (numpy) constants / padding are baked once at trace time.
    pe = jax.jit(functools.partial(
        positional_encoding, num_freqs=num_freqs, freq_factor=np.pi,
        include_input=True, block_rows=128))   # small tile only to exercise a 3-step grid
    out = jax.block_until_ready(pe(x))

    ref = _reference(x, num_freqs=num_freqs, freq_factor=np.pi, include_input=True)

    assert out.shape == (batch, 2 * num_freqs * d_in + d_in), out.shape
    # Tolerance absorbs the tiny difference between the Pallas/Mosaic sin
    # approximation and XLA's jnp.sin for large arguments (|x| * 32*pi).
    np.testing.assert_allclose(np.asarray(out), np.asarray(ref), rtol=2e-4, atol=2e-4)
    print("KERNEL_OK")
</pallas_src>

<mosaic_0001>
module attributes {stable_mosaic.version = 11 : i64} {
  func.func @_pos_enc_kernel(%arg0: i32, %arg1: memref<128x3xf32, #tpu.memory_space<vmem>>, %arg2: memref<3x36xf32, #tpu.memory_space<vmem>>, %arg3: memref<1x36xf32, #tpu.memory_space<vmem>>, %arg4: memref<128x39xf32, #tpu.memory_space<vmem>>) attributes {dimension_semantics = [#tpu.dimension_semantics<parallel>], iteration_bounds = array<i64: 3>, scalar_prefetch = 0 : i64, scratch_operands = 0 : i64, tpu.core_type = #tpu.core_type<tc>, window_params = [{transform_indices = @transform_0, window_bounds = array<i64: 128, 3>}, {pipeline_mode = #tpu.pipeline_mode<synchronous>, transform_indices = @transform_1, window_bounds = array<i64: 3, 36>}, {pipeline_mode = #tpu.pipeline_mode<synchronous>, transform_indices = @transform_2, window_bounds = array<i64: 1, 36>}, {transform_indices = @transform_3, window_bounds = array<i64: 128, 39>}]} {
    %c0 = arith.constant 0 : index
    %c0_0 = arith.constant 0 : index
    %0 = vector.load %arg1[%c0, %c0_0] : memref<128x3xf32, #tpu.memory_space<vmem>>, vector<128x3xf32>
    %c0_1 = arith.constant 0 : index
    %c0_2 = arith.constant 0 : index
    %1 = vector.load %arg2[%c0_1, %c0_2] : memref<3x36xf32, #tpu.memory_space<vmem>>, vector<3x36xf32>
    %cst = arith.constant dense<0.000000e+00> : vector<128x36xf32>
    %2 = tpu.matmul %0, %1, %cst {dimension_numbers = #tpu.dot_dimension_numbers<[1], [0], [0], [1], [0, 0, 1, 1], [], []>, precision = #tpu.contract_precision<fp32>} : vector<128x3xf32>, vector<3x36xf32>, vector<128x36xf32> -> vector<128x36xf32>
    %c0_3 = arith.constant 0 : index
    %c0_4 = arith.constant 0 : index
    %3 = vector.load %arg3[%c0_3, %c0_4] : memref<1x36xf32, #tpu.memory_space<vmem>>, vector<1x36xf32>
    %4 = vector.broadcast %3 : vector<1x36xf32> to vector<128x36xf32>
    %5 = arith.addf %2, %4 : vector<128x36xf32>
    %6 = math.sin %5 : vector<128x36xf32>
    %c0_5 = arith.constant 0 : index
    %c0_6 = arith.constant 0 : index
    %7 = vector.load %arg4[%c0_5, %c0_6] : memref<128x39xf32, #tpu.memory_space<vmem>>, vector<128x3xf32>
    tpu.vector_store %arg4[%c0_5, %c0_6], %0 {strides = array<i32>} : memref<128x39xf32, #tpu.memory_space<vmem>>, vector<128x3xf32>,
    %c0_7 = arith.constant 0 : index
    %c3 = arith.constant 3 : index
    %8 = vector.load %arg4[%c0_7, %c3] : memref<128x39xf32, #tpu.memory_space<vmem>>, vector<128x36xf32>
    tpu.vector_store %arg4[%c0_7, %c3], %6 {strides = array<i32>} : memref<128x39xf32, #tpu.memory_space<vmem>>, vector<128x36xf32>,
    return
  }
  func.func @transform_0(%arg0: i32) -> (i32, i32) {
    %c0_i32 = arith.constant 0 : i32
    %c0_i32_0 = arith.constant 0 : i32
    return %arg0, %c0_i32 : i32, i32
  }
  func.func @transform_1(%arg0: i32) -> (i32, i32) {
    %c0_i32 = arith.constant 0 : i32
    %c0_i32_0 = arith.constant 0 : i32
    %c0_i32_1 = arith.constant 0 : i32
    return %c0_i32, %c0_i32_0 : i32, i32
  }
  func.func @transform_2(%arg0: i32) -> (i32, i32) {
    %c0_i32 = arith.constant 0 : i32
    %c0_i32_0 = arith.constant 0 : i32
    %c0_i32_1 = arith.constant 0 : i32
    return %c0_i32, %c0_i32_0 : i32, i32
  }
  func.func @transform_3(%arg0: i32) -> (i32, i32) {
    %c0_i32 = arith.constant 0 : i32
    %c0_i32_0 = arith.constant 0 : i32
    return %arg0, %c0_i32 : i32, i32
  }
}

</mosaic_0001>

<llo_original>
// kernel: positional_encoding.1
$region0: #{positional_encoding.1}
  #allocation0 [shape = 'u32[]', space=smem, size = 0x4, offset = 0x4, fixed_abs, tag = 'smem constant byte address 0x4 - core index']
  #allocation1 [shape = 'u32[144,128]{1,0:T(1,128)}', space=vmem, size = 0x12000, scoped, tag = 'internal scratch']
  %s0 = inlined_call_operand.vmem [shape: f32[384,3], index: 0, kind: input, shape index: {}]
  %s1 = inlined_call_operand.vmem [shape: f32[3,36], index: 1, kind: input, shape index: {}]
  %s2 = inlined_call_operand.vmem [shape: f32[1,36], index: 2, kind: input, shape index: {}]
  %s3 = inlined_call_operand.vmem [shape: f32[384,39], index: 3, kind: output, shape index: {}]
  %s4 = sld [smem:[#allocation0]]
  $region45: #{positional_encoding.1} parent=0
    _
  %s6 = ssub.s32 1, %s4
  %s7 = scalar_select 0, %s6, %s4
  loop: start=0, step=1, limit=5
  $region2: #{positional_encoding.1} parent=0 // loop_pre_header
    _
  $region3: #{positional_encoding.1} parent=0 // loop_header
    %s9 = sphi 0, %s13
    %p10 = scmp.ge.s32.totalorder %s9, 5
    %s19 = sphi 0, %s21
    %s22 = sphi 0, %s19
    %s23 = sphi 0, %s22
    %s39 = sphi 0, %s23
    %s43 = sphi 0, %s43
    %s45 = sphi 0, %s43
    %s46 = sphi 0, %s45
    %s60 = sphi 0, %s46
    %s64 = sphi 0, %s64
    %s66 = sphi 0, %s64
    %s67 = sphi 0, %s66
    %s81 = sphi 0, %s67
    %s87 = sphi 0, %s89
    %s90 = sphi 0, %s87
    %s91 = sphi 0, %s90
    %s107 = sphi 0, %s91
  $region4: #{positional_encoding.1} parent=0 // loop_header_branch
    %12 = sbr.rel (%p10) target = $region8
  $region5: #{positional_encoding.1} parent=0 // loop_body
    %s14 = ssub.s32 %s9, 1
    %s15 = ssub.s32 %s9, 2
    %s16 = sadd.s32 %s9, 1
    %s17 = ssub.s32 %s9, %s16
    %p18 = scmp.eq.s32.totalorder %s17, 0
    %s20 = sadd.s32 %s19, 1
    %s21 = scalar_select %p18, %s19, %s20
    %p24 = pneg %p18
    %p25 = scmp.eq.s32.totalorder %s9, 2
    %p26 = por %p24, %p25
    %p27 = scmp.ne.s32.totalorder %s19, %s22
    %p28 = scmp.eq.s32.totalorder %s9, 0
    %p29 = por %p27, %p28
    %p30 = scmp.ne.s32.totalorder %s19, %s22
    %p31 = scmp.eq.s32.totalorder %s14, 2
    %p32 = por %p30, %p31
    %p33 = scmp.ne.s32.totalorder %s22, %s23
    %p34 = scmp.eq.s32.totalorder %s14, 0
    %p35 = por %p33, %p34
    %p36 = scmp.ne.s32.totalorder %s22, %s23
    %p37 = scmp.eq.s32.totalorder %s15, 2
    %p38 = por %p36, %p37
    %p40 = scmp.ne.s32.totalorder %s23, %s39
    %p41 = scmp.eq.s32.totalorder %s15, 0
    %p42 = por %p40, %p41
    %s44 = sadd.s32 %s43, 1
    %p47 = scmp.eq.s32.totalorder %s9, 2
    %p48 = scmp.ne.s32.totalorder %s43, %s45
    %p49 = scmp.eq.s32.totalorder %s9, 0
    %p50 = por %p48, %p49
    %p51 = scmp.ne.s32.totalorder %s43, %s45
    %p52 = scmp.eq.s32.totalorder %s14, 2
    %p53 = por %p51, %p52
    %p54 = scmp.ne.s32.totalorder %s45, %s46
    %p55 = scmp.eq.s32.totalorder %s14, 0
    %p56 = por %p54, %p55
    %p57 = scmp.ne.s32.totalorder %s45, %s46
    %p58 = scmp.eq.s32.totalorder %s15, 2
    %p59 = por %p57, %p58
    %p61 = scmp.ne.s32.totalorder %s46, %s60
    %p62 = scmp.eq.s32.totalorder %s15, 0
    %p63 = por %p61, %p62
    %s65 = sadd.s32 %s64, 1
    %p68 = scmp.eq.s32.totalorder %s9, 2
    %p69 = scmp.ne.s32.totalorder %s64, %s66
    %p70 = scmp.eq.s32.totalorder %s9, 0
    %p71 = por %p69, %p70
    %p72 = scmp.ne.s32.totalorder %s64, %s66
    %p73 = scmp.eq.s32.totalorder %s14, 2
    %p74 = por %p72, %p73
    %p75 = scmp.ne.s32.totalorder %s66, %s67
    %p76 = scmp.eq.s32.totalorder %s14, 0
    %p77 = por %p75, %p76
    %p78 = scmp.ne.s32.totalorder %s66, %s67
    %p79 = scmp.eq.s32.totalorder %s15, 2
    %p80 = por %p78, %p79
    %p82 = scmp.ne.s32.totalorder %s67, %s81
    %p83 = scmp.eq.s32.totalorder %s15, 0
    %p84 = por %p82, %p83
    %s85 = ssub.s32 %s9, %s16
    %p86 = scmp.eq.s32.totalorder %s85, 0
    %s88 = sadd.s32 %s87, 1
    %s89 = scalar_select %p86, %s87, %s88
    %p92 = pneg %p86
    %p93 = scmp.eq.s32.totalorder %s9, 2
    %p94 = por %p92, %p93
    %p95 = scmp.ne.s32.totalorder %s87, %s90
    %p96 = scmp.eq.s32.totalorder %s9, 0
    %p97 = por %p95, %p96
    %p98 = scmp.ne.s32.totalorder %s87, %s90
    %p99 = scmp.eq.s32.totalorder %s14, 2
    %p100 = por %p98, %p99
    %p101 = scmp.ne.s32.totalorder %s90, %s91
    %p102 = scmp.eq.s32.totalorder %s14, 0
    %p103 = por %p101, %p102
    %p104 = scmp.ne.s32.totalorder %s90, %s91
    %p105 = scmp.eq.s32.totalorder %s15, 2
    %p106 = por %p104, %p105
    %p108 = scmp.ne.s32.totalorder %s91, %s107
    %p109 = scmp.eq.s32.totalorder %s15, 0
    %p110 = por %p108, %p109
    %p111 = scmp.le.s32.totalorder 1, %s9
    %p112 = scmp.lt.s32.totalorder %s9, 4
    %p113 = pnand %p111, %p112
    %p114 = pneg %p113
    // Predicated region
    $region9: #{positional_encoding.1} parent=5 // pred_check
      _
    $region10: #{positional_encoding.1} parent=5 // pred_check_branch
      %116 = sbr.rel (%p113) target = $region12
    $region11: #{positional_encoding.1} parent=5 // pred_region
      %s117 = ssub.s32 %s9, 1
      // Predicated region
      $region13: #{positional_encoding.1} parent=11 // pred_check
        %p118 = pneg %p56
      $region14: #{positional_encoding.1} parent=11 // pred_check_branch
        %120 = sbr.rel (%p118) target = $region16
      $region15: #{positional_encoding.1} parent=11 // pred_region
        _
      $region16: #{positional_encoding.1} parent=11 // pred_fallthru
        _
      // Predicated region
      $region17: #{positional_encoding.1} parent=11 // pred_check
        %p121 = pneg %p77
      $region18: #{positional_encoding.1} parent=11 // pred_check_branch
        %123 = sbr.rel (%p121) target = $region20
      $region19: #{positional_encoding.1} parent=11 // pred_region
        _
      $region20: #{positional_encoding.1} parent=11 // pred_fallthru
        _
    $region12: #{positional_encoding.1} parent=5 // pred_fallthru
      _
    %p124 = scmp.lt.s32.totalorder %s9, 3
    // Predicated region
    $region21: #{positional_encoding.1} parent=5 // pred_check
      %p125 = pneg %p124
    $region22: #{positional_encoding.1} parent=5 // pred_check_branch
      %127 = sbr.rel (%p125) target = $region24
    $region23: #{positional_encoding.1} parent=5 // pred_region
      // Predicated region
      $region25: #{positional_encoding.1} parent=23 // pred_check
        %p128 = pneg %p29
      $region26: #{positional_encoding.1} parent=23 // pred_check_branch
        %130 = sbr.rel (%p128) target = $region28
      $region27: #{positional_encoding.1} parent=23 // pred_region
        %s131 = smul.u32 16, %s9
        %p132 = scmp.lt.s32.totalorder %s131, 47
        %s133 = scalar_select %p132, %s131, 47
        %s134 = smul.addr %s133, 8
        %s135 = scalar_lea.vmem %s0, %s134
        %s136 = smul.u32 16, %s9
      $region28: #{positional_encoding.1} parent=23 // pred_fallthru
        _
    $region24: #{positional_encoding.1} parent=5 // pred_fallthru
      _
    %p137 = scmp.le.s32.totalorder 1, %s9
    %p138 = scmp.lt.s32.totalorder %s9, 4
    %p139 = pnand %p137, %p138
    %p140 = pneg %p139
    // Predicated region
    $region29: #{positional_encoding.1} parent=5 // pred_check
      _
    $region30: #{positional_encoding.1} parent=5 // pred_check_branch
      %142 = sbr.rel (%p139) target = $region32
    $region31: #{positional_encoding.1} parent=5 // pred_region
      %s143 = ssub.s32 %s9, 1
      %s144 = smul.u32 16, %s14
      %p145 = scmp.lt.s32.totalorder %s144, 47
      %s146 = scalar_select %p145, %s144, 47
      %s147 = smul.addr %s146, 8
      %s148 = scalar_lea.vmem %s0, %s147
      %p149 = pneg %p35
      %p150 = pneg %p32
      %p151 = pneg %p56
      %p152 = pneg %p53
      %p153 = pneg %p77
      %p154 = pneg %p74
      %p155 = pneg %p103
      %p156 = pneg %p100
      %s157 = smul.u32 16, %s14
      %p158 = scmp.lt.s32.totalorder %s157, 47
      %s159 = scalar_select %p158, %s157, 47
      %s160 = smul.addr %s159, 8
      %s161 = scalar_lea.vmem %s3, %s160
      %s162 = smul.u32 16, %s14
      %p163 = scmp.lt.s32.totalorder %s162, 47
      %s164 = scalar_select %p163, %s162, 47
      %s165 = smul.addr %s164, 8
      %s166 = scalar_lea.vmem %s0, %s165
      %s167 = smul.u32 16, %s14
      %s168 = smul.u32 16, %s14
      %p169 = scmp.lt.s32.totalorder %s168, 47
      %s170 = scalar_select %p169, %s168, 47
      %s171 = smul.addr %s170, 8
      %s172 = scalar_lea.vmem %s3, %s171
      %s173 = smul.u32 16, %s14
      %v174 = vld [vmem:[%s166] sm:$0xff]
      %v175 = vld [vmem:[%s166 + $0x8] sm:$0xff]
      %v176 = vld [vmem:[%s166 + $0x10] sm:$0xff]
      %v177 = vld [vmem:[%s166 + $0x18] sm:$0xff]
      %v178 = vld [vmem:[%s166 + $0x20] sm:$0xff]
      %v179 = vld [vmem:[%s166 + $0x28] sm:$0xff]
      %v180 = vld [vmem:[%s166 + $0x30] sm:$0xff]
      %v181 = vld [vmem:[%s166 + $0x38] sm:$0xff]
      %v182 = vld [vmem:[%s166 + $0x40] sm:$0xff]
      %v183 = vld [vmem:[%s166 + $0x48] sm:$0xff]
      %v184 = vld [vmem:[%s166 + $0x50] sm:$0xff]
      %v185 = vld [vmem:[%s166 + $0x58] sm:$0xff]
      %v186 = vld [vmem:[%s166 + $0x60] sm:$0xff]
      %v187 = vld [vmem:[%s166 + $0x68] sm:$0xff]
      %v188 = vld [vmem:[%s166 + $0x70] sm:$0xff]
      %v189 = vld [vmem:[%s166 + $0x78] sm:$0xff]
      %v190 = vld [vmem:[%s1] sm:$0x7]
      %v191 = vld [vmem:[%s2] sm:$0x1]
      %v193 = vlaneseq
      %v194 = vshrl.u32 %v193, 7
      %v195 = vsub.s32 0, %v194
      %v196 = vrot.slane %v191, %v195
      %vm198 = vcmask 23552
      %v200 = vsel %vm198, %v174, 0
      %v203 = vsel %vm198, %v175, 0
      %v206 = vsel %vm198, %v176, 0
      %v209 = vsel %vm198, %v177, 0
      %v212 = vsel %vm198, %v178, 0
      %v215 = vsel %vm198, %v179, 0
      %v218 = vsel %vm198, %v180, 0
      %v221 = vsel %vm198, %v181, 0
      %v224 = vsel %vm198, %v182, 0
      %v227 = vsel %vm198, %v183, 0
      %v230 = vsel %vm198, %v184, 0
      %v233 = vsel %vm198, %v185, 0
      %v236 = vsel %vm198, %v186, 0
      %v239 = vsel %vm198, %v187, 0
      %v242 = vsel %vm198, %v188, 0
      %v245 = vsel %vm198, %v189, 0
      %vm247 = vcmask 1042432
      %v249 = vsel %vm247, %v190, 0
      %251 = vmatprep.subr.mxu0 0.0
      %v252 = vand.u32 %v249, 4294901760
      %253 = vmatpush1.msra.mxu0 %v252
      %254 = vmatprep.subr.mxu0 0.0
      %255 = vmatpush1.msra.mxu0 0.0
      %256 = vmatprep.subr.mxu0 0.0
      %257 = vmatpush1.msra.mxu0 0.0
      %258 = vmatprep.subr.mxu0 0.0
      %259 = vmatpush1.msra.mxu0 0.0
      %260 = vmatprep.subr.mxu0 0.0
      %261 = vmatpush1.msra.mxu0 0.0
      %262 = vmatprep.subr.mxu0 0.0
      %263 = vmatpush1.msra.mxu0 0.0
      %264 = vmatprep.subr.mxu0 0.0
      %265 = vmatpush1.msra.mxu0 0.0
      %266 = vmatprep.subr.mxu0 0.0
      %267 = vmatpush1.msra.mxu0 0.0
      %268 = vmatprep.subr.mxu0 0.0
      %269 = vmatpush1.msra.mxu0 0.0
      %270 = vmatprep.subr.mxu0 0.0
      %271 = vmatpush1.msra.mxu0 0.0
      %272 = vmatprep.subr.mxu0 0.0
      %273 = vmatpush1.msra.mxu0 0.0
      %274 = vmatprep.subr.mxu0 0.0
      %275 = vmatpush1.msra.mxu0 0.0
      %276 = vmatprep.subr.mxu0 0.0
      %277 = vmatpush1.msra.mxu0 0.0
      %278 = vmatprep.subr.mxu0 0.0
      %279 = vmatpush1.msra.mxu0 0.0
      %280 = vmatprep.subr.mxu0 0.0
      %281 = vmatpush1.msra.mxu0 0.0
      %282 = vmatprep.subr.mxu0 0.0
      %283 = vmatpush1.msra.mxu0 0.0
      %284 = vmatprep.subr.mxu0 0.0
      %285 = vmatpush1.msra.mxu0 0.0
      %286 = vmatprep.subr.mxu0 0.0
      %287 = vmatpush1.msra.mxu0 0.0
      %288 = vmatprep.subr.mxu0 0.0
      %289 = vmatpush1.msra.mxu0 0.0
      %290 = vmatprep.subr.mxu0 0.0
      %291 = vmatpush1.msra.mxu0 0.0
      %292 = vmatprep.subr.mxu0 0.0
      %293 = vmatpush1.msra.mxu0 0.0
      %294 = vmatprep.subr.mxu0 0.0
      %295 = vmatpush1.msra.mxu0 0.0
      %296 = vmatprep.subr.mxu0 0.0
      %297 = vmatpush1.msra.mxu0 0.0
      %298 = vmatprep.subr.mxu0 0.0
      %299 = vmatpush1.msra.mxu0 0.0
      %300 = vmatprep.subr.mxu0 0.0
      %301 = vmatpush1.msra.mxu0 0.0
      %302 = vmatprep.subr.mxu0 0.0
      %303 = vmatpush1.msra.mxu0 0.0
      %304 = vmatprep.subr.mxu0 0.0
      %305 = vmatpush1.msra.mxu0 0.0
      %306 = vmatprep.subr.mxu0 0.0
      %307 = vmatpush1.msra.mxu0 0.0
      %308 = vmatprep.subr.mxu0 0.0
      %309 = vmatpush1.msra.mxu0 0.0
      %310 = vmatprep.subr.mxu0 0.0
      %311 = vmatpush1.msra.mxu0 0.0
      %312 = vmatprep.subr.mxu0 0.0
      %313 = vmatpush1.msra.mxu0 0.0
      %314 = vmatprep.subr.mxu0 0.0
      %315 = vmatpush1.msra.mxu0 0.0
      %316 = vmatprep.mubr.f32.mxu0 0.0
      %v317 = vand.u32 %v200, 4294901760
      %v318 = vsub.f32 %v200, %v317
      %v319 = vand.u32 %v318, 4294901760
      %v320 = vsub.f32 %v318, %v319
      %v321 = vand.u32 %v320, 4294901760
      %322 = vmatmul.mubr.f32.gmra.mrb[0].mxu0 %v321
      %v323 = vpop.f32.mrb[0].mxu0
      %v324 = vadd.f32 %v196, %v323
      %v325 = vpop.f32.mrb[0].mxu0
      %326 = vmatprep.mubr.f32.mxu0 0.0
      %v327 = vand.u32 %v203, 4294901760
      %v328 = vsub.f32 %v203, %v327
      %v329 = vand.u32 %v328, 4294901760
      %v330 = vsub.f32 %v328, %v329
      %v331 = vand.u32 %v330, 4294901760
      %332 = vmatmul.mubr.f32.gmra.mrb[0].mxu0 %v331
      %v333 = vpop.f32.mrb[0].mxu0
      %v334 = vadd.f32 %v196, %v333
      %v335 = vpop.f32.mrb[0].mxu0
      %336 = vmatprep.mubr.f32.mxu0 0.0
      %v337 = vand.u32 %v206, 4294901760
      %v338 = vsub.f32 %v206, %v337
      %v339 = vand.u32 %v338, 4294901760
      %v340 = vsub.f32 %v338, %v339
      %v341 = vand.u32 %v340, 4294901760
      %342 = vmatmul.mubr.f32.gmra.mrb[0].mxu0 %v341
      %v343 = vpop.f32.mrb[0].mxu0
      %v344 = vadd.f32 %v196, %v343
      %v345 = vpop.f32.mrb[0].mxu0
      %346 = vmatprep.mubr.f32.mxu0 0.0
      %v347 = vand.u32 %v209, 4294901760
      %v348 = vsub.f32 %v209, %v347
      %v349 = vand.u32 %v348, 4294901760
      %v350 = vsub.f32 %v348, %v349
      %v351 = vand.u32 %v350, 4294901760
      %352 = vmatmul.mubr.f32.gmra.mrb[0].mxu0 %v351
      %v353 = vpop.f32.mrb[0].mxu0
      %v354 = vadd.f32 %v196, %v353
      %v355 = vpop.f32.mrb[0].mxu0
      %356 = vmatprep.mubr.f32.mxu0 0.0
      %v357 = vand.u32 %v212, 4294901760
      %v358 = vsub.f32 %v212, %v357
      %v359 = vand.u32 %v358, 4294901760
      %v360 = vsub.f32 %v358, %v359
      %v361 = vand.u32 %v360, 4294901760
      %362 = vmatmul.mubr.f32.gmra.mrb[0].mxu0 %v361
      %v363 = vpop.f32.mrb[0].mxu0
      %v364 = vadd.f32 %v196, %v363
      %v365 = vpop.f32.mrb[0].mxu0
      %366 = vmatprep.mubr.f32.mxu0 0.0
      %v367 = vand.u32 %v215, 4294901760
      %v368 = vsub.f32 %v215, %v367
      %v369 = vand.u32 %v368, 4294901760
      %v370 = vsub.f32 %v368, %v369
      %v371 = vand.u32 %v370, 4294901760
      %372 = vmatmul.mubr.f32.gmra.mrb[0].mxu0 %v371
      %v373 = vpop.f32.mrb[0].mxu0
      %v374 = vadd.f32 %v196, %v373
      %v375 = vpop.f32.mrb[0].mxu0
      %376 = vmatprep.mubr.f32.mxu0 0.0
      %v377 = vand.u32 %v218, 4294901760
      %v378 = vsub.f32 %v218, %v377
      %v379 = vand.u32 %v378, 4294901760
      %v380 = vsub.f32 %v378, %v379
      %v381 = vand.u32 %v380, 4294901760
      %382 = vmatmul.mubr.f32.gmra.mrb[0].mxu0 %v381
      %v383 = vpop.f32.mrb[0].mxu0
      %v384 = vadd.f32 %v196, %v383
      %v385 = vpop.f32.mrb[0].mxu0
      %386 = vmatprep.mubr.f32.mxu0 0.0
      %v387 = vand.u32 %v221, 4294901760
      %v388 = vsub.f32 %v221, %v387
      %v389 = vand.u32 %v388, 4294901760
      %v390 = vsub.f32 %v388, %v389
      %v391 = vand.u32 %v390, 4294901760
      %392 = vmatmul.mubr.f32.gmra.mrb[0].mxu0 %v391
      %v393 = vpop.f32.mrb[0].mxu0
      %v394 = vadd.f32 %v196, %v393
      %v395 = vpop.f32.mrb[0].mxu0
      %396 = vmatprep.mubr.f32.mxu0 0.0
      %v397 = vand.u32 %v224, 4294901760
      %v398 = vsub.f32 %v224, %v397
      %v399 = vand.u32 %v398, 4294901760
      %v400 = vsub.f32 %v398, %v399
      %v401 = vand.u32 %v400, 4294901760
      %402 = vmatmul.mubr.f32.gmra.mrb[0].mxu0 %v401
      %v403 = vpop.f32.mrb[0].mxu0
      %v404 = vadd.f32 %v196, %v403
      %v405 = vpop.f32.mrb[0].mxu0
      %406 = vmatprep.mubr.f32.mxu0 0.0
      %v407 = vand.u32 %v227, 4294901760
      %v408 = vsub.f32 %v227, %v407
      %v409 = vand.u32 %v408, 4294901760
      %v410 = vsub.f32 %v408, %v409
      %v411 = vand.u32 %v410, 4294901760
      %412 = vmatmul.mubr.f32.gmra.mrb[0].mxu0 %v411
      %v413 = vpop.f32.mrb[0].mxu0
      %v414 = vadd.f32 %v196, %v413
      %v415 = vpop.f32.mrb[0].mxu0
      %416 = vmatprep.mubr.f32.mxu0 0.0
      %v417 = vand.u32 %v230, 4294901760
      %v418 = vsub.f32 %v230, %v417
      %v419 = vand.u32 %v418, 4294901760
      %v420 = vsub.f32 %v418, %v419
      %v421 = vand.u32 %v420, 4294901760
      %422 = vmatmul.mubr.f32.gmra.mrb[0].mxu0 %v421
      %v423 = vpop.f32.mrb[0].mxu0
      %v424 = vadd.f32 %v196, %v423
      %v425 = vpop.f32.mrb[0].mxu0
      %426 = vmatprep.mubr.f32.mxu0 0.0
      %v427 = vand.u32 %v233, 4294901760
      %v428 = vsub.f32 %v233, %v427
      %v429 = vand.u32 %v428, 4294901760
      %v430 = vsub.f32 %v428, %v429
      %v431 = vand.u32 %v430, 4294901760
      %432 = vmatmul.mubr.f32.gmra.mrb[0].mxu0 %v431
      %v433 = vpop.f32.mrb[0].mxu0
      %v434 = vadd.f32 %v196, %v433
      %v435 = vpop.f32.mrb[0].mxu0
      %436 = vmatprep.mubr.f32.mxu0 0.0
      %v437 = vand.u32 %v236, 4294901760
      %v438 = vsub.f32 %v236, %v437
      %v439 = vand.u32 %v438, 4294901760
      %v440 = vsub.f32 %v438, %v439
      %v441 = vand.u32 %v440, 4294901760
      %442 = vmatmul.mubr.f32.gmra.mrb[0].mxu0 %v441
      %v443 = vpop.f32.mrb[0].mxu0
      %v444 = vadd.f32 %v196, %v443
      %v445 = vpop.f32.mrb[0].mxu0
      %446 = vmatprep.mubr.f32.mxu0 0.0
      %v447 = vand.u32 %v239, 4294901760
      %v448 = vsub.f32 %v239, %v447
      %v449 = vand.u32 %v448, 4294901760
      %v450 = vsub.f32 %v448, %v449
      %v451 = vand.u32 %v450, 4294901760
      %452 = vmatmul.mubr.f32.gmra.mrb[0].mxu0 %v451
      %v453 = vpop.f32.mrb[0].mxu0
      %v454 = vadd.f32 %v196, %v453
      %v455 = vpop.f32.mrb[0].mxu0
      %456 = vmatprep.mubr.f32.mxu0 0.0
      %v457 = vand.u32 %v242, 4294901760
      %v458 = vsub.f32 %v242, %v457
      %v459 = vand.u32 %v458, 4294901760
      %v460 = vsub.f32 %v458, %v459
      %v461 = vand.u32 %v460, 4294901760
      %462 = vmatmul.mubr.f32.gmra.mrb[0].mxu0 %v461
      %v463 = vpop.f32.mrb[0].mxu0
      %v464 = vadd.f32 %v196, %v463
      %v465 = vpop.f32.mrb[0].mxu0
      %466 = vmatprep.mubr.f32.mxu0 0.0
      %v467 = vand.u32 %v245, 4294901760
      %v468 = vsub.f32 %v245, %v467
      %v469 = vand.u32 %v468, 4294901760
      %v470 = vsub.f32 %v468, %v469
      %v471 = vand.u32 %v470, 4294901760
      %472 = vmatmul.mubr.f32.gmra.mrb[0].mxu0 %v471
      %v473 = vpop.f32.mrb[0].mxu0
      %v474 = vadd.f32 %v196, %v473
      %v475 = vpop.f32.mrb[0].mxu0
      %476 = vdwg.mxu0
      %477 = vmatprep.subr.mxu0 0.0
      %v478 = vand.u32 %v249, 4294901760
      %v479 = vsub.f32 %v249, %v478
      %v480 = vand.u32 %v479, 4294901760
      %v481 = vsub.f32 %v479, %v480
      %v482 = vand.u32 %v481, 4294901760
      %483 = vmatpush1.msra.mxu0 %v482
      %484 = vmatprep.subr.mxu0 0.0
      %485 = vmatpush1.msra.mxu0 0.0
      %486 = vmatprep.subr.mxu0 0.0
      %487 = vmatpush1.msra.mxu0 0.0
      %488 = vmatprep.subr.mxu0 0.0
      %489 = vmatpush1.msra.mxu0 0.0
      %490 = vmatprep.subr.mxu0 0.0
      %491 = vmatpush1.msra.mxu0 0.0
      %492 = vmatprep.subr.mxu0 0.0
      %493 = vmatpush1.msra.mxu0 0.0
      %494 = vmatprep.subr.mxu0 0.0
      %495 = vmatpush1.msra.mxu0 0.0
      %496 = vmatprep.subr.mxu0 0.0
      %497 = vmatpush1.msra.mxu0 0.0
      %498 = vmatprep.subr.mxu0 0.0
      %499 = vmatpush1.msra.mxu0 0.0
      %500 = vmatprep.subr.mxu0 0.0
      %501 = vmatpush1.msra.mxu0 0.0
      %502 = vmatprep.subr.mxu0 0.0
      %503 = vmatpush1.msra.mxu0 0.0
      %504 = vmatprep.subr.mxu0 0.0
      %505 = vmatpush1.msra.mxu0 0.0
      %506 = vmatprep.subr.mxu0 0.0
      %507 = vmatpush1.msra.mxu0 0.0
      %508 = vmatprep.subr.mxu0 0.0
      %509 = vmatpush1.msra.mxu0 0.0
      %510 = vmatprep.subr.mxu0 0.0
      %511 = vmatpush1.msra.mxu0 0.0
      %512 = vmatprep.subr.mxu0 0.0
      %513 = vmatpush1.msra.mxu0 0.0
      %514 = vmatprep.subr.mxu0 0.0
      %515 = vmatpush1.msra.mxu0 0.0
      %516 = vmatprep.subr.mxu0 0.0
      %517 = vmatpush1.msra.mxu0 0.0
      %518 = vmatprep.subr.mxu0 0.0
      %519 = vmatpush1.msra.mxu0 0.0
      %520 = vmatprep.subr.mxu0 0.0
      %521 = vmatpush1.msra.mxu0 0.0
      %522 = vmatprep.subr.mxu0 0.0
      %523 = vmatpush1.msra.mxu0 0.0
      %524 = vmatprep.subr.mxu0 0.0
      %525 = vmatpush1.msra.mxu0 0.0
      %526 = vmatprep.subr.mxu0 0.0
      %527 = vmatpush1.msra.mxu0 0.0
      %528 = vmatprep.subr.mxu0 0.0
      %529 = vmatpush1.msra.mxu0 0.0
      %530 = vmatprep.subr.mxu0 0.0
      %531 = vmatpush1.msra.mxu0 0.0
      %532 = vmatprep.subr.mxu0 0.0
      %533 = vmatpush1.msra.mxu0 0.0
      %534 = vmatprep.subr.mxu0 0.0
      %535 = vmatpush1.msra.mxu0 0.0
      %536 = vmatprep.subr.mxu0 0.0
      %537 = vmatpush1.msra.mxu0 0.0
      %538 = vmatprep.subr.mxu0 0.0
      %539 = vmatpush1.msra.mxu0 0.0
      %540 = vmatprep.subr.mxu0 0.0
      %541 = vmatpush1.msra.mxu0 0.0
      %542 = vmatprep.subr.mxu0 0.0
      %543 = vmatpush1.msra.mxu0 0.0
      %544 = vmatprep.subr.mxu0 0.0
      %545 = vmatpush1.msra.mxu0 0.0
      %546 = vmatprep.mubr.f32.mxu0 0.0
      %v547 = vand.u32 %v200, 4294901760
      %548 = vmatmul.mubr.f32.gmra.mrb[0].mxu0 %v547
      %v549 = vpop.f32.mrb[0].mxu0
      %v550 = vadd.f32 %v324, %v549
      %v551 = vpop.f32.mrb[0].mxu0
      %552 = vmatprep.mubr.f32.mxu0 0.0
      %v553 = vand.u32 %v203, 4294901760
      %554 = vmatmul.mubr.f32.gmra.mrb[0].mxu0 %v553
      %v555 = vpop.f32.mrb[0].mxu0
      %v556 = vadd.f32 %v334, %v555
      %v557 = vpop.f32.mrb[0].mxu0
      %558 = vmatprep.mubr.f32.mxu0 0.0
      %v559 = vand.u32 %v206, 4294901760
      %560 = vmatmul.mubr.f32.gmra.mrb[0].mxu0 %v559
      %v561 = vpop.f32.mrb[0].mxu0
      %v562 = vadd.f32 %v344, %v561
      %v563 = vpop.f32.mrb[0].mxu0
      %564 = vmatprep.mubr.f32.mxu0 0.0
      %v565 = vand.u32 %v209, 4294901760
      %566 = vmatmul.mubr.f32.gmra.mrb[0].mxu0 %v565
      %v567 = vpop.f32.mrb[0].mxu0
      %v568 = vadd.f32 %v354, %v567
      %v569 = vpop.f32.mrb[0].mxu0
      %570 = vmatprep.mubr.f32.mxu0 0.0
      %v571 = vand.u32 %v212, 4294901760
      %572 = vmatmul.mubr.f32.gmra.mrb[0].mxu0 %v571
      %v573 = vpop.f32.mrb[0].mxu0
      %v574 = vadd.f32 %v364, %v573
      %v575 = vpop.f32.mrb[0].mxu0
      %576 = vmatprep.mubr.f32.mxu0 0.0
      %v577 = vand.u32 %v215, 4294901760
      %578 = vmatmul.mubr.f32.gmra.mrb[0].mxu0 %v577
      %v579 = vpop.f32.mrb[0].mxu0
      %v580 = vadd.f32 %v374, %v579
      %v581 = vpop.f32.mrb[0].mxu0
      %582 = vmatprep.mubr.f32.mxu0 0.0
      %v583 = vand.u32 %v218, 4294901760
      %584 = vmatmul.mubr.f32.gmra.mrb[0].mxu0 %v583
      %v585 = vpop.f32.mrb[0].mxu0
      %v586 = vadd.f32 %v384, %v585
      %v587 = vpop.f32.mrb[0].mxu0
      %588 = vmatprep.mubr.f32.mxu0 0.0
      %v589 = vand.u32 %v221, 4294901760
      %590 = vmatmul.mubr.f32.gmra.mrb[0].mxu0 %v589
      %v591 = vpop.f32.mrb[0].mxu0
      %v592 = vadd.f32 %v394, %v591
      %v593 = vpop.f32.mrb[0].mxu0
      %594 = vmatprep.mubr.f32.mxu0 0.0
      %v595 = vand.u32 %v224, 4294901760
      %596 = vmatmul.mubr.f32.gmra.mrb[0].mxu0 %v595
      %v597 = vpop.f32.mrb[0].mxu0
      %v598 = vadd.f32 %v404, %v597
      %v599 = vpop.f32.mrb[0].mxu0
      %600 = vmatprep.mubr.f32.mxu0 0.0
      %v601 = vand.u32 %v227, 4294901760
      %602 = vmatmul.mubr.f32.gmra.mrb[0].mxu0 %v601
      %v603 = vpop.f32.mrb[0].mxu0
      %v604 = vadd.f32 %v414, %v603
      %v605 = vpop.f32.mrb[0].mxu0
      %606 = vmatprep.mubr.f32.mxu0 0.0
      %v607 = vand.u32 %v230, 4294901760
      %608 = vmatmul.mubr.f32.gmra.mrb[0].mxu0 %v607
      %v609 = vpop.f32.mrb[0].mxu0
      %v610 = vadd.f32 %v424, %v609
      %v611 = vpop.f32.mrb[0].mxu0
      %612 = vmatprep.mubr.f32.mxu0 0.0
      %v613 = vand.u32 %v233, 4294901760
      %614 = vmatmul.mubr.f32.gmra.mrb[0].mxu0 %v613
      %v615 = vpop.f32.mrb[0].mxu0
      %v616 = vadd.f32 %v434, %v615
      %v617 = vpop.f32.mrb[0].mxu0
      %618 = vmatprep.mubr.f32.mxu0 0.0
      %v619 = vand.u32 %v236, 4294901760
      %620 = vmatmul.mubr.f32.gmra.mrb[0].mxu0 %v619
      %v621 = vpop.f32.mrb[0].mxu0
      %v622 = vadd.f32 %v444, %v621
      %v623 = vpop.f32.mrb[0].mxu0
      %624 = vmatprep.mubr.f32.mxu0 0.0
      %v625 = vand.u32 %v239, 4294901760
      %626 = vmatmul.mubr.f32.gmra.mrb[0].mxu0 %v625
      %v627 = vpop.f32.mrb[0].mxu0
      %v628 = vadd.f32 %v454, %v627
      %v629 = vpop.f32.mrb[0].mxu0
      %630 = vmatprep.mubr.f32.mxu0 0.0
      %v631 = vand.u32 %v242, 4294901760
      %632 = vmatmul.mubr.f32.gmra.mrb[0].mxu0 %v631
      %v633 = vpop.f32.mrb[0].mxu0
      %v634 = vadd.f32 %v464, %v633
      %v635 = vpop.f32.mrb[0].mxu0
      %636 = vmatprep.mubr.f32.mxu0 0.0
      %v637 = vand.u32 %v245, 4294901760
      %638 = vmatmul.mubr.f32.gmra.mrb[0].mxu0 %v637
      %v639 = vpop.f32.mrb[0].mxu0
      %v640 = vadd.f32 %v474, %v639
      %v641 = vpop.f32.mrb[0].mxu0
      %642 = vdwg.mxu0
      %643 = vmatprep.subr.mxu0 0.0
      %v644 = vand.u32 %v249, 4294901760
      %v645 = vsub.f32 %v249, %v644
      %646 = vmatpush1.msra.mxu0 %v645
      %647 = vmatprep.subr.mxu0 0.0
      %648 = vmatpush1.msra.mxu0 0.0
      %649 = vmatprep.subr.mxu0 0.0
      %650 = vmatpush1.msra.mxu0 0.0
      %651 = vmatprep.subr.mxu0 0.0
      %652 = vmatpush1.msra.mxu0 0.0
      %653 = vmatprep.subr.mxu0 0.0
      %654 = vmatpush1.msra.mxu0 0.0
      %655 = vmatprep.subr.mxu0 0.0
      %656 = vmatpush1.msra.mxu0 0.0
      %657 = vmatprep.subr.mxu0 0.0
      %658 = vmatpush1.msra.mxu0 0.0
      %659 = vmatprep.subr.mxu0 0.0
      %660 = vmatpush1.msra.mxu0 0.0
      %661 = vmatprep.subr.mxu0 0.0
      %662 = vmatpush1.msra.mxu0 0.0
      %663 = vmatprep.subr.mxu0 0.0
      %664 = vmatpush1.msra.mxu0 0.0
      %665 = vmatprep.subr.mxu0 0.0
      %666 = vmatpush1.msra.mxu0 0.0
      %667 = vmatprep.subr.mxu0 0.0
      %668 = vmatpush1.msra.mxu0 0.0
      %669 = vmatprep.subr.mxu0 0.0
      %670 = vmatpush1.msra.mxu0 0.0
      %671 = vmatprep.subr.mxu0 0.0
      %672 = vmatpush1.msra.mxu0 0.0
      %673 = vmatprep.subr.mxu0 0.0
      %674 = vmatpush1.msra.mxu0 0.0
      %675 = vmatprep.subr.mxu0 0.0
      %676 = vmatpush1.msra.mxu0 0.0
      %677 = vmatprep.subr.mxu0 0.0
      %678 = vmatpush1.msra.mxu0 0.0
      %679 = vmatprep.subr.mxu0 0.0
      %680 = vmatpush1.msra.mxu0 0.0
      %681 = vmatprep.subr.mxu0 0.0
      %682 = vmatpush1.msra.mxu0 0.0
      %683 = vmatprep.subr.mxu0 0.0
      %684 = vmatpush1.msra.mxu0 0.0
      %685 = vmatprep.subr.mxu0 0.0
      %686 = vmatpush1.msra.mxu0 0.0
      %687 = vmatprep.subr.mxu0 0.0
      %688 = vmatpush1.msra.mxu0 0.0
      %689 = vmatprep.subr.mxu0 0.0
      %690 = vmatpush1.msra.mxu0 0.0
      %691 = vmatprep.subr.mxu0 0.0
      %692 = vmatpush1.msra.mxu0 0.0
      %693 = vmatprep.subr.mxu0 0.0
      %694 = vmatpush1.msra.mxu0 0.0
      %695 = vmatprep.subr.mxu0 0.0
      %696 = vmatpush1.msra.mxu0 0.0
      %697 = vmatprep.subr.mxu0 0.0
      %698 = vmatpush1.msra.mxu0 0.0
      %699 = vmatprep.subr.mxu0 0.0
      %700 = vmatpush1.msra.mxu0 0.0
      %701 = vmatprep.subr.mxu0 0.0
      %702 = vmatpush1.msra.mxu0 0.0
      %703 = vmatprep.subr.mxu0 0.0
      %704 = vmatpush1.msra.mxu0 0.0
      %705 = vmatprep.subr.mxu0 0.0
      %706 = vmatpush1.msra.mxu0 0.0
      %707 = vmatprep.subr.mxu0 0.0
      %708 = vmatpush1.msra.mxu0 0.0
      %709 = vmatprep.mubr.f32.mxu0 0.0
      %v710 = vand.u32 %v200, 4294901760
      %v711 = vsub.f32 %v200, %v710
      %712 = vmatmul.mubr.f32.gmra.mrb[0].mxu0 %v711
      %v713 = vpop.f32.mrb[0].mxu0
      %v714 = vadd.f32 %v550, %v713
      %v715 = vpop.f32.mrb[0].mxu0
      %716 = vmatprep.mubr.f32.mxu0 0.0
      %v717 = vand.u32 %v203, 4294901760
      %v718 = vsub.f32 %v203, %v717
      %719 = vmatmul.mubr.f32.gmra.mrb[0].mxu0 %v718
      %v720 = vpop.f32.mrb[0].mxu0
      %v721 = vadd.f32 %v556, %v720
      %v722 = vpop.f32.mrb[0].mxu0
      %723 = vmatprep.mubr.f32.mxu0 0.0
      %v724 = vand.u32 %v206, 4294901760
      %v725 = vsub.f32 %v206, %v724
      %726 = vmatmul.mubr.f32.gmra.mrb[0].mxu0 %v725
      %v727 = vpop.f32.mrb[0].mxu0
      %v728 = vadd.f32 %v562, %v727
      %v729 = vpop.f32.mrb[0].mxu0
      %730 = vmatprep.mubr.f32.mxu0 0.0
      %v731 = vand.u32 %v209, 4294901760
      %v732 = vsub.f32 %v209, %v731
      %733 = vmatmul.mubr.f32.gmra.mrb[0].mxu0 %v732
      %v734 = vpop.f32.mrb[0].mxu0
      %v735 = vadd.f32 %v568, %v734
      %v736 = vpop.f32.mrb[0].mxu0
      %737 = vmatprep.mubr.f32.mxu0 0.0
      %v738 = vand.u32 %v212, 4294901760
      %v739 = vsub.f32 %v212, %v738
      %740 = vmatmul.mubr.f32.gmra.mrb[0].mxu0 %v739
      %v741 = vpop.f32.mrb[0].mxu0
      %v742 = vadd.f32 %v574, %v741
      %v743 = vpop.f32.mrb[0].mxu0
      %744 = vmatprep.mubr.f32.mxu0 0.0
      %v745 = vand.u32 %v215, 4294901760
      %v746 = vsub.f32 %v215, %v745
      %747 = vmatmul.mubr.f32.gmra.mrb[0].mxu0 %v746
      %v748 = vpop.f32.mrb[0].mxu0
      %v749 = vadd.f32 %v580, %v748
      %v750 = vpop.f32.mrb[0].mxu0
      %751 = vmatprep.mubr.f32.mxu0 0.0
      %v752 = vand.u32 %v218, 4294901760
      %v753 = vsub.f32 %v218, %v752
      %754 = vmatmul.mubr.f32.gmra.mrb[0].mxu0 %v753
      %v755 = vpop.f32.mrb[0].mxu0
      %v756 = vadd.f32 %v586, %v755
      %v757 = vpop.f32.mrb[0].mxu0
      %758 = vmatprep.mubr.f32.mxu0 0.0
      %v759 = vand.u32 %v221, 4294901760
      %v760 = vsub.f32 %v221, %v759
      %761 = vmatmul.mubr.f32.gmra.mrb[0].mxu0 %v760
      %v762 = vpop.f32.mrb[0].mxu0
      %v763 = vadd.f32 %v592, %v762
      %v764 = vpop.f32.mrb[0].mxu0
      %765 = vmatprep.mubr.f32.mxu0 0.0
      %v766 = vand.u32 %v224, 4294901760
      %v767 = vsub.f32 %v224, %v766
      %768 = vmatmul.mubr.f32.gmra.mrb[0].mxu0 %v767
      %v769 = vpop.f32.mrb[0].mxu0
      %v770 = vadd.f32 %v598, %v769
      %v771 = vpop.f32.mrb[0].mxu0
      %772 = vmatprep.mubr.f32.mxu0 0.0
      %v773 = vand.u32 %v227, 4294901760
      %v774 = vsub.f32 %v227, %v773
      %775 = vmatmul.mubr.f32.gmra.mrb[0].mxu0 %v774
      %v776 = vpop.f32.mrb[0].mxu0
      %v777 = vadd.f32 %v604, %v776
      %v778 = vpop.f32.mrb[0].mxu0
      %779 = vmatprep.mubr.f32.mxu0 0.0
      %v780 = vand.u32 %v230, 4294901760
      %v781 = vsub.f32 %v230, %v780
      %782 = vmatmul.mubr.f32.gmra.mrb[0].mxu0 %v781
      %v783 = vpop.f32.mrb[0].mxu0
      %v784 = vadd.f32 %v610, %v783
      %v785 = vpop.f32.mrb[0].mxu0
      %786 = vmatprep.mubr.f32.mxu0 0.0
      %v787 = vand.u32 %v233, 4294901760
      %v788 = vsub.f32 %v233, %v787
      %789 = vmatmul.mubr.f32.gmra.mrb[0].mxu0 %v788
      %v790 = vpop.f32.mrb[0].mxu0
      %v791 = vadd.f32 %v616, %v790
      %v792 = vpop.f32.mrb[0].mxu0
      %793 = vmatprep.mubr.f32.mxu0 0.0
      %v794 = vand.u32 %v236, 4294901760
      %v795 = vsub.f32 %v236, %v794
      %796 = vmatmul.mubr.f32.gmra.mrb[0].mxu0 %v795
      %v797 = vpop.f32.mrb[0].mxu0
      %v798 = vadd.f32 %v622, %v797
      %v799 = vpop.f32.mrb[0].mxu0
      %800 = vmatprep.mubr.f32.mxu0 0.0
      %v801 = vand.u32 %v239, 4294901760
      %v802 = vsub.f32 %v239, %v801
      %803 = vmatmul.mubr.f32.gmra.mrb[0].mxu0 %v802
      %v804 = vpop.f32.mrb[0].mxu0
      %v805 = vadd.f32 %v628, %v804
      %v806 = vpop.f32.mrb[0].mxu0
      %807 = vmatprep.mubr.f32.mxu0 0.0
      %v808 = vand.u32 %v242, 4294901760
      %v809 = vsub.f32 %v242, %v808
      %810 = vmatmul.mubr.f32.gmra.mrb[0].mxu0 %v809
      %v811 = vpop.f32.mrb[0].mxu0
      %v812 = vadd.f32 %v634, %v811
      %v813 = vpop.f32.mrb[0].mxu0
      %814 = vmatprep.mubr.f32.mxu0 0.0
      %v815 = vand.u32 %v245, 4294901760
      %v816 = vsub.f32 %v245, %v815
      %817 = vmatmul.mubr.f32.gmra.mrb[0].mxu0 %v816
      %v818 = vpop.f32.mrb[0].mxu0
      %v819 = vadd.f32 %v640, %v818
      %v820 = vpop.f32.mrb[0].mxu0
      %821 = vdwg.mxu0
      %822 = vmatprep.subr.mxu0 0.0
      %v823 = vand.u32 %v249, 4294901760
      %824 = vmatpush1.msra.mxu0 %v823
      %825 = vmatprep.subr.mxu0 0.0
      %826 = vmatpush1.msra.mxu0 0.0
      %827 = vmatprep.subr.mxu0 0.0
      %828 = vmatpush1.msra.mxu0 0.0
      %829 = vmatprep.subr.mxu0 0.0
      %830 = vmatpush1.msra.mxu0 0.0
      %831 = vmatprep.subr.mxu0 0.0
      %832 = vmatpush1.msra.mxu0 0.0
      %833 = vmatprep.subr.mxu0 0.0
      %834 = vmatpush1.msra.mxu0 0.0
      %835 = vmatprep.subr.mxu0 0.0
      %836 = vmatpush1.msra.mxu0 0.0
      %837 = vmatprep.subr.mxu0 0.0
      %838 = vmatpush1.msra.mxu0 0.0
      %839 = vmatprep.subr.mxu0 0.0
      %840 = vmatpush1.msra.mxu0 0.0
      %841 = vmatprep.subr.mxu0 0.0
      %842 = vmatpush1.msra.mxu0 0.0
      %843 = vmatprep.subr.mxu0 0.0
      %844 = vmatpush1.msra.mxu0 0.0
      %845 = vmatprep.subr.mxu0 0.0
      %846 = vmatpush1.msra.mxu0 0.0
      %847 = vmatprep.subr.mxu0 0.0
      %848 = vmatpush1.msra.mxu0 0.0
      %849 = vmatprep.subr.mxu0 0.0
      %850 = vmatpush1.msra.mxu0 0.0
      %851 = vmatprep.subr.mxu0 0.0
      %852 = vmatpush1.msra.mxu0 0.0
      %853 = vmatprep.subr.mxu0 0.0
      %854 = vmatpush1.msra.mxu0 0.0
      %855 = vmatprep.subr.mxu0 0.0
      %856 = vmatpush1.msra.mxu0 0.0
      %857 = vmatprep.subr.mxu0 0.0
      %858 = vmatpush1.msra.mxu0 0.0
      %859 = vmatprep.subr.mxu0 0.0
      %860 = vmatpush1.msra.mxu0 0.0
      %861 = vmatprep.subr.mxu0 0.0
      %862 = vmatpush1.msra.mxu0 0.0
      %863 = vmatprep.subr.mxu0 0.0
      %864 = vmatpush1.msra.mxu0 0.0
      %865 = vmatprep.subr.mxu0 0.0
      %866 = vmatpush1.msra.mxu0 0.0
      %867 = vmatprep.subr.mxu0 0.0
      %868 = vmatpush1.msra.mxu0 0.0
      %869 = vmatprep.subr.mxu0 0.0
      %870 = vmatpush1.msra.mxu0 0.0
      %871 = vmatprep.subr.mxu0 0.0
      %872 = vmatpush1.msra.mxu0 0.0
      %873 = vmatprep.subr.mxu0 0.0
      %874 = vmatpush1.msra.mxu0 0.0
      %875 = vmatprep.subr.mxu0 0.0
      %876 = vmatpush1.msra.mxu0 0.0
      %877 = vmatprep.subr.mxu0 0.0
      %878 = vmatpush1.msra.mxu0 0.0
      %879 = vmatprep.subr.mxu0 0.0
      %880 = vmatpush1.msra.mxu0 0.0
      %881 = vmatprep.subr.mxu0 0.0
      %882 = vmatpush1.msra.mxu0 0.0
      %883 = vmatprep.subr.mxu0 0.0
      %884 = vmatpush1.msra.mxu0 0.0
      %885 = vmatprep.subr.mxu0 0.0
      %886 = vmatpush1.msra.mxu0 0.0
      %887 = vmatprep.mubr.f32.mxu0 0.0
      %v888 = vand.u32 %v200, 4294901760
      %v889 = vsub.f32 %v200, %v888
      %v890 = vand.u32 %v889, 4294901760
      %891 = vmatmul.mubr.f32.gmra.mrb[0].mxu0 %v890
      %v892 = vpop.f32.mrb[0].mxu0
      %v893 = vadd.f32 %v714, %v892
      %v894 = vpop.f32.mrb[0].mxu0
      %895 = vmatprep.mubr.f32.mxu0 0.0
      %v896 = vand.u32 %v203, 4294901760
      %v897 = vsub.f32 %v203, %v896
      %v898 = vand.u32 %v897, 4294901760
      %899 = vmatmul.mubr.f32.gmra.mrb[0].mxu0 %v898
      %v900 = vpop.f32.mrb[0].mxu0
      %v901 = vadd.f32 %v721, %v900
      %v902 = vpop.f32.mrb[0].mxu0
      %903 = vmatprep.mubr.f32.mxu0 0.0
      %v904 = vand.u32 %v206, 4294901760
      %v905 = vsub.f32 %v206, %v904
      %v906 = vand.u32 %v905, 4294901760
      %907 = vmatmul.mubr.f32.gmra.mrb[0].mxu0 %v906
      %v908 = vpop.f32.mrb[0].mxu0
      %v909 = vadd.f32 %v728, %v908
      %v910 = vpop.f32.mrb[0].mxu0
      %911 = vmatprep.mubr.f32.mxu0 0.0
      %v912 = vand.u32 %v209, 4294901760
      %v913 = vsub.f32 %v209, %v912
      %v914 = vand.u32 %v913, 4294901760
      %915 = vmatmul.mubr.f32.gmra.mrb[0].mxu0 %v914
      %v916 = vpop.f32.mrb[0].mxu0
      %v917 = vadd.f32 %v735, %v916
      %v918 = vpop.f32.mrb[0].mxu0
      %919 = vmatprep.mubr.f32.mxu0 0.0
      %v920 = vand.u32 %v212, 4294901760
      %v921 = vsub.f32 %v212, %v920
      %v922 = vand.u32 %v921, 4294901760
      %923 = vmatmul.mubr.f32.gmra.mrb[0].mxu0 %v922
      %v924 = vpop.f32.mrb[0].mxu0
      %v925 = vadd.f32 %v742, %v924
      %v926 = vpop.f32.mrb[0].mxu0
      %927 = vmatprep.mubr.f32.mxu0 0.0
      %v928 = vand.u32 %v215, 4294901760
      %v929 = vsub.f32 %v215, %v928
      %v930 = vand.u32 %v929, 4294901760
      %931 = vmatmul.mubr.f32.gmra.mrb[0].mxu0 %v930
      %v932 = vpop.f32.mrb[0].mxu0
      %v933 = vadd.f32 %v749, %v932
      %v934 = vpop.f32.mrb[0].mxu0
      %935 = vmatprep.mubr.f32.mxu0 0.0
      %v936 = vand.u32 %v218, 4294901760
      %v937 = vsub.f32 %v218, %v936
      %v938 = vand.u32 %v937, 4294901760
      %939 = vmatmul.mubr.f32.gmra.mrb[0].mxu0 %v938
      %v940 = vpop.f32.mrb[0].mxu0
      %v941 = vadd.f32 %v756, %v940
      %v942 = vpop.f32.mrb[0].mxu0
      %943 = vmatprep.mubr.f32.mxu0 0.0
      %v944 = vand.u32 %v221, 4294901760
      %v945 = vsub.f32 %v221, %v944
      %v946 = vand.u32 %v945, 4294901760
      %947 = vmatmul.mubr.f32.gmra.mrb[0].mxu0 %v946
      %v948 = vpop.f32.mrb[0].mxu0
      %v949 = vadd.f32 %v763, %v948
      %v950 = vpop.f32.mrb[0].mxu0
      %951 = vmatprep.mubr.f32.mxu0 0.0
      %v952 = vand.u32 %v224, 4294901760
      %v953 = vsub.f32 %v224, %v952
      %v954 = vand.u32 %v953, 4294901760
      %955 = vmatmul.mubr.f32.gmra.mrb[0].mxu0 %v954
      %v956 = vpop.f32.mrb[0].mxu0
      %v957 = vadd.f32 %v770, %v956
      %v958 = vpop.f32.mrb[0].mxu0
      %959 = vmatprep.mubr.f32.mxu0 0.0
      %v960 = vand.u32 %v227, 4294901760
      %v961 = vsub.f32 %v227, %v960
      %v962 = vand.u32 %v961, 4294901760
      %963 = vmatmul.mubr.f32.gmra.mrb[0].mxu0 %v962
      %v964 = vpop.f32.mrb[0].mxu0
      %v965 = vadd.f32 %v777, %v964
      %v966 = vpop.f32.mrb[0].mxu0
      %967 = vmatprep.mubr.f32.mxu0 0.0
      %v968 = vand.u32 %v230, 4294901760
      %v969 = vsub.f32 %v230, %v968
      %v970 = vand.u32 %v969, 4294901760
      %971 = vmatmul.mubr.f32.gmra.mrb[0].mxu0 %v970
      %v972 = vpop.f32.mrb[0].mxu0
      %v973 = vadd.f32 %v784, %v972
      %v974 = vpop.f32.mrb[0].mxu0
      %975 = vmatprep.mubr.f32.mxu0 0.0
      %v976 = vand.u32 %v233, 4294901760
      %v977 = vsub.f32 %v233, %v976
      %v978 = vand.u32 %v977, 4294901760
      %979 = vmatmul.mubr.f32.gmra.mrb[0].mxu0 %v978
      %v980 = vpop.f32.mrb[0].mxu0
      %v981 = vadd.f32 %v791, %v980
      %v982 = vpop.f32.mrb[0].mxu0
      %983 = vmatprep.mubr.f32.mxu0 0.0
      %v984 = vand.u32 %v236, 4294901760
      %v985 = vsub.f32 %v236, %v984
      %v986 = vand.u32 %v985, 4294901760
      %987 = vmatmul.mubr.f32.gmra.mrb[0].mxu0 %v986
      %v988 = vpop.f32.mrb[0].mxu0
      %v989 = vadd.f32 %v798, %v988
      %v990 = vpop.f32.mrb[0].mxu0
      %991 = vmatprep.mubr.f32.mxu0 0.0
      %v992 = vand.u32 %v239, 4294901760
      %v993 = vsub.f32 %v239, %v992
      %v994 = vand.u32 %v993, 4294901760
      %995 = vmatmul.mubr.f32.gmra.mrb[0].mxu0 %v994
      %v996 = vpop.f32.mrb[0].mxu0
      %v997 = vadd.f32 %v805, %v996
      %v998 = vpop.f32.mrb[0].mxu0
      %999 = vmatprep.mubr.f32.mxu0 0.0
      %v1000 = vand.u32 %v242, 4294901760
      %v1001 = vsub.f32 %v242, %v1000
      %v1002 = vand.u32 %v1001, 4294901760
      %1003 = vmatmul.mubr.f32.gmra.mrb[0].mxu0 %v1002
      %v1004 = vpop.f32.mrb[0].mxu0
      %v1005 = vadd.f32 %v812, %v1004
      %v1006 = vpop.f32.mrb[0].mxu0
      %1007 = vmatprep.mubr.f32.mxu0 0.0
      %v1008 = vand.u32 %v245, 4294901760
      %v1009 = vsub.f32 %v245, %v1008
      %v1010 = vand.u32 %v1009, 4294901760
      %1011 = vmatmul.mubr.f32.gmra.mrb[0].mxu0 %v1010
      %v1012 = vpop.f32.mrb[0].mxu0
      %v1013 = vadd.f32 %v819, %v1012
      %v1014 = vpop.f32.mrb[0].mxu0
      %1015 = vdwg.mxu0
      %1016 = vmatprep.subr.mxu0 0.0
      %v1017 = vand.u32 %v249, 4294901760
      %v1018 = vsub.f32 %v249, %v1017
      %v1019 = vand.u32 %v1018, 4294901760
      %1020 = vmatpush1.msra.mxu0 %v1019
      %1021 = vmatprep.subr.mxu0 0.0
      %1022 = vmatpush1.msra.mxu0 0.0
      %1023 = vmatprep.subr.mxu0 0.0
      %1024 = vmatpush1.msra.mxu0 0.0
      %1025 = vmatprep.subr.mxu0 0.0
      %1026 = vmatpush1.msra.mxu0 0.0
      %1027 = vmatprep.subr.mxu0 0.0
      %1028 = vmatpush1.msra.mxu0 0.0
      %1029 = vmatprep.subr.mxu0 0.0
      %1030 = vmatpush1.msra.mxu0 0.0
      %1031 = vmatprep.subr.mxu0 0.0
      %1032 = vmatpush1.msra.mxu0 0.0
      %1033 = vmatprep.subr.mxu0 0.0
      %1034 = vmatpush1.msra.mxu0 0.0
      %1035 = vmatprep.subr.mxu0 0.0
      %1036 = vmatpush1.msra.mxu0 0.0
      %1037 = vmatprep.subr.mxu0 0.0
      %1038 = vmatpush1.msra.mxu0 0.0
      %1039 = vmatprep.subr.mxu0 0.0
      %1040 = vmatpush1.msra.mxu0 0.0
      %1041 = vmatprep.subr.mxu0 0.0
      %1042 = vmatpush1.msra.mxu0 0.0
      %1043 = vmatprep.subr.mxu0 0.0
      %1044 = vmatpush1.msra.mxu0 0.0
      %1045 = vmatprep.subr.mxu0 0.0
      %1046 = vmatpush1.msra.mxu0 0.0
      %1047 = vmatprep.subr.mxu0 0.0
      %1048 = vmatpush1.msra.mxu0 0.0
      %1049 = vmatprep.subr.mxu0 0.0
      %1050 = vmatpush1.msra.mxu0 0.0
      %1051 = vmatprep.subr.mxu0 0.0
      %1052 = vmatpush1.msra.mxu0 0.0
      %1053 = vmatprep.subr.mxu0 0.0
      %1054 = vmatpush1.msra.mxu0 0.0
      %1055 = vmatprep.subr.mxu0 0.0
      %1056 = vmatpush1.msra.mxu0 0.0
      %1057 = vmatprep.subr.mxu0 0.0
      %1058 = vmatpush1.msra.mxu0 0.0
      %1059 = vmatprep.subr.mxu0 0.0
      %1060 = vmatpush1.msra.mxu0 0.0
      %1061 = vmatprep.subr.mxu0 0.0
      %1062 = vmatpush1.msra.mxu0 0.0
      %1063 = vmatprep.subr.mxu0 0.0
      %1064 = vmatpush1.msra.mxu0 0.0
      %1065 = vmatprep.subr.mxu0 0.0
      %1066 = vmatpush1.msra.mxu0 0.0
      %1067 = vmatprep.subr.mxu0 0.0
      %1068 = vmatpush1.msra.mxu0 0.0
      %1069 = vmatprep.subr.mxu0 0.0
      %1070 = vmatpush1.msra.mxu0 0.0
      %1071 = vmatprep.subr.mxu0 0.0
      %1072 = vmatpush1.msra.mxu0 0.0
      %1073 = vmatprep.subr.mxu0 0.0
      %1074 = vmatpush1.msra.mxu0 0.0
      %1075 = vmatprep.subr.mxu0 0.0
      %1076 = vmatpush1.msra.mxu0 0.0
      %1077 = vmatprep.subr.mxu0 0.0
      %1078 = vmatpush1.msra.mxu0 0.0
      %1079 = vmatprep.subr.mxu0 0.0
      %1080 = vmatpush1.msra.mxu0 0.0
      %1081 = vmatprep.subr.mxu0 0.0
      %1082 = vmatpush1.msra.mxu0 0.0
      %1083 = vmatprep.mubr.f32.mxu0 0.0
      %v1084 = vand.u32 %v200, 4294901760
      %1085 = vmatmul.mubr.f32.gmra.mrb[0].mxu0 %v1084
      %v1086 = vpop.f32.mrb[0].mxu0
      %v1087 = vadd.f32 %v893, %v1086
      %v1088 = vpop.f32.mrb[0].mxu0
      %1089 = vmatprep.mubr.f32.mxu0 0.0
      %v1090 = vand.u32 %v203, 4294901760
      %1091 = vmatmul.mubr.f32.gmra.mrb[0].mxu0 %v1090
      %v1092 = vpop.f32.mrb[0].mxu0
      %v1093 = vadd.f32 %v901, %v1092
      %v1094 = vpop.f32.mrb[0].mxu0
      %1095 = vmatprep.mubr.f32.mxu0 0.0
      %v1096 = vand.u32 %v206, 4294901760
      %1097 = vmatmul.mubr.f32.gmra.mrb[0].mxu0 %v1096
      %v1098 = vpop.f32.mrb[0].mxu0
      %v1099 = vadd.f32 %v909, %v1098
      %v1100 = vpop.f32.mrb[0].mxu0
      %1101 = vmatprep.mubr.f32.mxu0 0.0
      %v1102 = vand.u32 %v209, 4294901760
      %1103 = vmatmul.mubr.f32.gmra.mrb[0].mxu0 %v1102
      %v1104 = vpop.f32.mrb[0].mxu0
      %v1105 = vadd.f32 %v917, %v1104
      %v1106 = vpop.f32.mrb[0].mxu0
      %1107 = vmatprep.mubr.f32.mxu0 0.0
      %v1108 = vand.u32 %v212, 4294901760
      %1109 = vmatmul.mubr.f32.gmra.mrb[0].mxu0 %v1108
      %v1110 = vpop.f32.mrb[0].mxu0
      %v1111 = vadd.f32 %v925, %v1110
      %v1112 = vpop.f32.mrb[0].mxu0
      %1113 = vmatprep.mubr.f32.mxu0 0.0
      %v1114 = vand.u32 %v215, 4294901760
      %1115 = vmatmul.mubr.f32.gmra.mrb[0].mxu0 %v1114
      %v1116 = vpop.f32.mrb[0].mxu0
      %v1117 = vadd.f32 %v933, %v1116
      %v1118 = vpop.f32.mrb[0].mxu0
      %1119 = vmatprep.mubr.f32.mxu0 0.0
      %v1120 = vand.u32 %v218, 4294901760
      %1121 = vmatmul.mubr.f32.gmra.mrb[0].mxu0 %v1120
      %v1122 = vpop.f32.mrb[0].mxu0
      %v1123 = vadd.f32 %v941, %v1122
      %v1124 = vpop.f32.mrb[0].mxu0
      %1125 = vmatprep.mubr.f32.mxu0 0.0
      %v1126 = vand.u32 %v221, 4294901760
      %1127 = vmatmul.mubr.f32.gmra.mrb[0].mxu0 %v1126
      %v1128 = vpop.f32.mrb[0].mxu0
      %v1129 = vadd.f32 %v949, %v1128
      %v1130 = vpop.f32.mrb[0].mxu0
      %1131 = vmatprep.mubr.f32.mxu0 0.0
      %v1132 = vand.u32 %v224, 4294901760
      %1133 = vmatmul.mubr.f32.gmra.mrb[0].mxu0 %v1132
      %v1134 = vpop.f32.mrb[0].mxu0
      %v1135 = vadd.f32 %v957, %v1134
      %v1136 = vpop.f32.mrb[0].mxu0
      %1137 = vmatprep.mubr.f32.mxu0 0.0
      %v1138 = vand.u32 %v227, 4294901760
      %1139 = vmatmul.mubr.f32.gmra.mrb[0].mxu0 %v1138
      %v1140 = vpop.f32.mrb[0].mxu0
      %v1141 = vadd.f32 %v965, %v1140
      %v1142 = vpop.f32.mrb[0].mxu0
      %1143 = vmatprep.mubr.f32.mxu0 0.0
      %v1144 = vand.u32 %v230, 4294901760
      %1145 = vmatmul.mubr.f32.gmra.mrb[0].mxu0 %v1144
      %v1146 = vpop.f32.mrb[0].mxu0
      %v1147 = vadd.f32 %v973, %v1146
      %v1148 = vpop.f32.mrb[0].mxu0
      %1149 = vmatprep.mubr.f32.mxu0 0.0
      %v1150 = vand.u32 %v233, 4294901760
      %1151 = vmatmul.mubr.f32.gmra.mrb[0].mxu0 %v1150
      %v1152 = vpop.f32.mrb[0].mxu0
      %v1153 = vadd.f32 %v981, %v1152
      %v1154 = vpop.f32.mrb[0].mxu0
      %1155 = vmatprep.mubr.f32.mxu0 0.0
      %v1156 = vand.u32 %v236, 4294901760
      %1157 = vmatmul.mubr.f32.gmra.mrb[0].mxu0 %v1156
      %v1158 = vpop.f32.mrb[0].mxu0
      %v1159 = vadd.f32 %v989, %v1158
      %v1160 = vpop.f32.mrb[0].mxu0
      %1161 = vmatprep.mubr.f32.mxu0 0.0
      %v1162 = vand.u32 %v239, 4294901760
      %1163 = vmatmul.mubr.f32.gmra.mrb[0].mxu0 %v1162
      %v1164 = vpop.f32.mrb[0].mxu0
      %v1165 = vadd.f32 %v997, %v1164
      %v1166 = vpop.f32.mrb[0].mxu0
      %1167 = vmatprep.mubr.f32.mxu0 0.0
      %v1168 = vand.u32 %v242, 4294901760
      %1169 = vmatmul.mubr.f32.gmra.mrb[0].mxu0 %v1168
      %v1170 = vpop.f32.mrb[0].mxu0
      %v1171 = vadd.f32 %v1005, %v1170
      %v1172 = vpop.f32.mrb[0].mxu0
      %1173 = vmatprep.mubr.f32.mxu0 0.0
      %v1174 = vand.u32 %v245, 4294901760
      %1175 = vmatmul.mubr.f32.gmra.mrb[0].mxu0 %v1174
      %v1176 = vpop.f32.mrb[0].mxu0
      %v1177 = vadd.f32 %v1013, %v1176
      %v1178 = vpop.f32.mrb[0].mxu0
      %1179 = vdwg.mxu0
      %1180 = vmatprep.subr.mxu0 0.0
      %v1181 = vand.u32 %v249, 4294901760
      %1182 = vmatpush1.msra.mxu0 %v1181
      %1183 = vmatprep.subr.mxu0 0.0
      %1184 = vmatpush1.msra.mxu0 0.0
      %1185 = vmatprep.subr.mxu0 0.0
      %1186 = vmatpush1.msra.mxu0 0.0
      %1187 = vmatprep.subr.mxu0 0.0
      %1188 = vmatpush1.msra.mxu0 0.0
      %1189 = vmatprep.subr.mxu0 0.0
      %1190 = vmatpush1.msra.mxu0 0.0
      %1191 = vmatprep.subr.mxu0 0.0
      %1192 = vmatpush1.msra.mxu0 0.0
      %1193 = vmatprep.subr.mxu0 0.0
      %1194 = vmatpush1.msra.mxu0 0.0
      %1195 = vmatprep.subr.mxu0 0.0
      %1196 = vmatpush1.msra.mxu0 0.0
      %1197 = vmatprep.subr.mxu0 0.0
      %1198 = vmatpush1.msra.mxu0 0.0
      %1199 = vmatprep.subr.mxu0 0.0
      %1200 = vmatpush1.msra.mxu0 0.0
      %1201 = vmatprep.subr.mxu0 0.0
      %1202 = vmatpush1.msra.mxu0 0.0
      %1203 = vmatprep.subr.mxu0 0.0
      %1204 = vmatpush1.msra.mxu0 0.0
      %1205 = vmatprep.subr.mxu0 0.0
      %1206 = vmatpush1.msra.mxu0 0.0
      %1207 = vmatprep.subr.mxu0 0.0
      %1208 = vmatpush1.msra.mxu0 0.0
      %1209 = vmatprep.subr.mxu0 0.0
      %1210 = vmatpush1.msra.mxu0 0.0
      %1211 = vmatprep.subr.mxu0 0.0
      %1212 = vmatpush1.msra.mxu0 0.0
      %1213 = vmatprep.subr.mxu0 0.0
      %1214 = vmatpush1.msra.mxu0 0.0
      %1215 = vmatprep.subr.mxu0 0.0
      %1216 = vmatpush1.msra.mxu0 0.0
      %1217 = vmatprep.subr.mxu0 0.0
      %1218 = vmatpush1.msra.mxu0 0.0
      %1219 = vmatprep.subr.mxu0 0.0
      %1220 = vmatpush1.msra.mxu0 0.0
      %1221 = vmatprep.subr.mxu0 0.0
      %1222 = vmatpush1.msra.mxu0 0.0
      %1223 = vmatprep.subr.mxu0 0.0
      %1224 = vmatpush1.msra.mxu0 0.0
      %1225 = vmatprep.subr.mxu0 0.0
      %1226 = vmatpush1.msra.mxu0 0.0
      %1227 = vmatprep.subr.mxu0 0.0
      %1228 = vmatpush1.msra.mxu0 0.0
      %1229 = vmatprep.subr.mxu0 0.0
      %1230 = vmatpush1.msra.mxu0 0.0
      %1231 = vmatprep.subr.mxu0 0.0
      %1232 = vmatpush1.msra.mxu0 0.0
      %1233 = vmatprep.subr.mxu0 0.0
      %1234 = vmatpush1.msra.mxu0 0.0
      %1235 = vmatprep.subr.mxu0 0.0
      %1236 = vmatpush1.msra.mxu0 0.0
      %1237 = vmatprep.subr.mxu0 0.0
      %1238 = vmatpush1.msra.mxu0 0.0
      %1239 = vmatprep.subr.mxu0 0.0
      %1240 = vmatpush1.msra.mxu0 0.0
      %1241 = vmatprep.subr.mxu0 0.0
      %1242 = vmatpush1.msra.mxu0 0.0
      %1243 = vmatprep.subr.mxu0 0.0
      %1244 = vmatpush1.msra.mxu0 0.0
      %1245 = vmatprep.mubr.f32.mxu0 0.0
      %v1246 = vand.u32 %v200, 4294901760
      %1247 = vmatmul.mubr.f32.gmra.mrb[0].mxu0 %v1246
      %v1248 = vpop.f32.mrb[0].mxu0
      %v1249 = vadd.f32 %v1087, %v1248
      %v1250 = vpop.f32.mrb[0].mxu0
      %1251 = vmatprep.mubr.f32.mxu0 0.0
      %v1252 = vand.u32 %v203, 4294901760
      %1253 = vmatmul.mubr.f32.gmra.mrb[0].mxu0 %v1252
      %v1254 = vpop.f32.mrb[0].mxu0
      %v1255 = vadd.f32 %v1093, %v1254
      %v1256 = vpop.f32.mrb[0].mxu0
      %1257 = vmatprep.mubr.f32.mxu0 0.0
      %v1258 = vand.u32 %v206, 4294901760
      %1259 = vmatmul.mubr.f32.gmra.mrb[0].mxu0 %v1258
      %v1260 = vpop.f32.mrb[0].mxu0
      %v1261 = vadd.f32 %v1099, %v1260
      %v1262 = vpop.f32.mrb[0].mxu0
      %1263 = vmatprep.mubr.f32.mxu0 0.0
      %v1264 = vand.u32 %v209, 4294901760
      %1265 = vmatmul.mubr.f32.gmra.mrb[0].mxu0 %v1264
      %v1266 = vpop.f32.mrb[0].mxu0
      %v1267 = vadd.f32 %v1105, %v1266
      %v1268 = vpop.f32.mrb[0].mxu0
      %1269 = vmatprep.mubr.f32.mxu0 0.0
      %v1270 = vand.u32 %v212, 4294901760
      %1271 = vmatmul.mubr.f32.gmra.mrb[0].mxu0 %v1270
      %v1272 = vpop.f32.mrb[0].mxu0
      %v1273 = vadd.f32 %v1111, %v1272
      %v1274 = vpop.f32.mrb[0].mxu0
      %1275 = vmatprep.mubr.f32.mxu0 0.0
      %v1276 = vand.u32 %v215, 4294901760
      %1277 = vmatmul.mubr.f32.gmra.mrb[0].mxu0 %v1276
      %v1278 = vpop.f32.mrb[0].mxu0
      %v1279 = vadd.f32 %v1117, %v1278
      %v1280 = vpop.f32.mrb[0].mxu0
      %1281 = vmatprep.mubr.f32.mxu0 0.0
      %v1282 = vand.u32 %v218, 4294901760
      %1283 = vmatmul.mubr.f32.gmra.mrb[0].mxu0 %v1282
      %v1284 = vpop.f32.mrb[0].mxu0
      %v1285 = vadd.f32 %v1123, %v1284
      %v1286 = vpop.f32.mrb[0].mxu0
      %1287 = vmatprep.mubr.f32.mxu0 0.0
      %v1288 = vand.u32 %v221, 4294901760
      %1289 = vmatmul.mubr.f32.gmra.mrb[0].mxu0 %v1288
      %v1290 = vpop.f32.mrb[0].mxu0
      %v1291 = vadd.f32 %v1129, %v1290
      %v1292 = vpop.f32.mrb[0].mxu0
      %1293 = vmatprep.mubr.f32.mxu0 0.0
      %v1294 = vand.u32 %v224, 4294901760
      %1295 = vmatmul.mubr.f32.gmra.mrb[0].mxu0 %v1294
      %v1296 = vpop.f32.mrb[0].mxu0
      %v1297 = vadd.f32 %v1135, %v1296
      %v1298 = vpop.f32.mrb[0].mxu0
      %1299 = vmatprep.mubr.f32.mxu0 0.0
      %v1300 = vand.u32 %v227, 4294901760
      %1301 = vmatmul.mubr.f32.gmra.mrb[0].mxu0 %v1300
      %v1302 = vpop.f32.mrb[0].mxu0
      %v1303 = vadd.f32 %v1141, %v1302
      %v1304 = vpop.f32.mrb[0].mxu0
      %1305 = vmatprep.mubr.f32.mxu0 0.0
      %v1306 = vand.u32 %v230, 4294901760
      %1307 = vmatmul.mubr.f32.gmra.mrb[0].mxu0 %v1306
      %v1308 = vpop.f32.mrb[0].mxu0
      %v1309 = vadd.f32 %v1147, %v1308
      %v1310 = vpop.f32.mrb[0].mxu0
      %1311 = vmatprep.mubr.f32.mxu0 0.0
      %v1312 = vand.u32 %v233, 4294901760
      %1313 = vmatmul.mubr.f32.gmra.mrb[0].mxu0 %v1312
      %v1314 = vpop.f32.mrb[0].mxu0
      %v1315 = vadd.f32 %v1153, %v1314
      %v1316 = vpop.f32.mrb[0].mxu0
      %1317 = vmatprep.mubr.f32.mxu0 0.0
      %v1318 = vand.u32 %v236, 4294901760
      %1319 = vmatmul.mubr.f32.gmra.mrb[0].mxu0 %v1318
      %v1320 = vpop.f32.mrb[0].mxu0
      %v1321 = vadd.f32 %v1159, %v1320
      %v1322 = vpop.f32.mrb[0].mxu0
      %1323 = vmatprep.mubr.f32.mxu0 0.0
      %v1324 = vand.u32 %v239, 4294901760
      %1325 = vmatmul.mubr.f32.gmra.mrb[0].mxu0 %v1324
      %v1326 = vpop.f32.mrb[0].mxu0
      %v1327 = vadd.f32 %v1165, %v1326
      %v1328 = vpop.f32.mrb[0].mxu0
      %1329 = vmatprep.mubr.f32.mxu0 0.0
      %v1330 = vand.u32 %v242, 4294901760
      %1331 = vmatmul.mubr.f32.gmra.mrb[0].mxu0 %v1330
      %v1332 = vpop.f32.mrb[0].mxu0
      %v1333 = vadd.f32 %v1171, %v1332
      %v1334 = vpop.f32.mrb[0].mxu0
      %1335 = vmatprep.mubr.f32.mxu0 0.0
      %v1336 = vand.u32 %v245, 4294901760
      %1337 = vmatmul.mubr.f32.gmra.mrb[0].mxu0 %v1336
      %v1338 = vpop.f32.mrb[0].mxu0
      %v1339 = vadd.f32 %v1177, %v1338
      %v1340 = vpop.f32.mrb[0].mxu0
      %1341 = vdwg.mxu0
      %v1342 = vand.u32 2147483647, %v1249
      %vm1343 = vcmp.le.f32.partialorder %v1342, 0.7853982
      %vm1344 = vcmp.lt.s32.totalorder %v1249, 0
      %v1345 = vand.u32 %v1249, 2139095040
      %v1346 = vshrl.u32 %v1345, 23
      %v1347 = vsub.s32 %v1346, 127
      %v1348 = vand.u32 2147483647, %v1249
      %v1349 = vand.u32 %v1348, 8388607
      %v1350 = vor.u32 %v1349, 8388608
      %v1351 = vsub.s32 0, %v1350
      %v1352 = vadd.s32 %v1347, 1
      %vm1353 = vcmp.gt.s32.totalorder %v1352, 0
      %v1354 = vsel %vm1353, %v1352, 0
      %v1355 = vshrl.u32 %v1354, 5
      %v1356 = vand.u32 %v1354, 31
      %v1357 = vsub.s32 32, %v1356
      %v1358 = vshrl.u32 683565275, %v1357
      %v1359 = vshll.u32 683565275, %v1356
      %v1360 = vshrl.u32 2475754826, %v1357
      %v1361 = vor.u32 %v1359, %v1360
      %v1362 = vshll.u32 2475754826, %v1356
      %v1363 = vshrl.u32 2131351028, %v1357
      %v1364 = vor.u32 %v1362, %v1363
      %v1365 = vshll.u32 2131351028, %v1356
      %v1366 = vshrl.u32 2102212464, %v1357
      %v1367 = vor.u32 %v1365, %v1366
      %v1368 = vshll.u32 2102212464, %v1356
      %v1369 = vshrl.u32 920167782, %v1357
      %v1370 = vor.u32 %v1368, %v1369
      %v1371 = vshll.u32 920167782, %v1356
      %v1372 = vshrl.u32 1326507024, %v1357
      %v1373 = vor.u32 %v1371, %v1372
      %vm1374 = vcmp.lt.s32.totalorder %v1355, 1
      %vm1375 = vcmp.lt.s32.totalorder %v1355, 2
      %vm1376 = vcmp.lt.s32.totalorder %v1355, 3
      %vm1377 = vcmp.lt.s32.totalorder %v1355, 4
      %v1378 = vsel %vm1374, %v1358, %v1361
      %v1379 = vsel %vm1377, %v1367, 2102212464
      %v1380 = vsel %vm1376, %v1364, %v1379
      %v1381 = vsel %vm1375, %v1378, %v1380
      %v1382 = vsel %vm1374, %v1361, %v1364
      %v1383 = vsel %vm1377, %v1370, 920167782
      %v1384 = vsel %vm1376, %v1367, %v1383
      %v1385 = vsel %vm1375, %v1382, %v1384
      %v1386 = vsel %vm1374, %v1364, %v1367
      %v1387 = vsel %vm1377, %v1373, 1326507024
      %v1388 = vsel %vm1376, %v1370, %v1387
      %v1389 = vsel %vm1375, %v1386, %v1388
      %v1390 = vshll.u32 %v1350, 8
      %v1391 = vmul.u32.u64.compose %v1390, %v1389
      %v1392 = vextract.low.u32 %v1391
      %v1393 = vextract.high.u32 %v1391
      %v1394 = vmul.u32.u64.compose %v1390, %v1385
      %v1395 = vextract.low.u32 %v1394
      %v1396 = vextract.high.u32 %v1394
      %v1397 = vmul.u32 %v1390, %v1381
      %v1398 = vadd.s32 %v1393, %v1395
      %vm1399 = vc.u32 %v1393, %v1395
      %v1400 = vadd.s32 %v1396, 1
      %v1401 = vsel %vm1399, %v1400, %v1396
      %v1402 = vadd.s32 %v1397, %v1401
      %v1403 = vadd.s32 %v1402, 536870912
      %v1404 = vshrl.u32 %v1403, 30
      %v1405 = vshll.u32 %v1404, 30
      %v1406 = vsub.s32 %v1402, %v1405
      %vm1407 = vcmp.lt.s32.totalorder %v1406, 0
      %v1408 = vsub.s32 0, %v1406
      %v1409 = vsel %vm1407, %v1408, %v1406
      %v1410 = vclz %v1409
      %v1411 = vsub.s32 %v1410, 2
      %vm1412 = vcmp.gt.s32.totalorder 0, %v1411
      %v1413 = vsel %vm1412, 0, %v1411
      %v1414 = vsub.s32 32, %v1413
      %v1415 = vshll.u32 %v1406, %v1413
      %v1416 = vshrl.u32 %v1398, %v1414
      %v1417 = vor.u32 %v1415, %v1416
      %v1418 = vsub.s32 4294967266, %v1413
      %v1419 = vadd.s32 %v1418, 127
      %v1420 = vshll.u32 %v1419, 23
      %v1421 = vor.u32 4788187, %v1420
      %v1422 = vand.u32 2147483647, %v1421
      %v1424 = vcvt.s32.f32 %v1417
      %v1425 = vmul.f32 %v1424, %v1422
      %v1426 = vxor.u32 %v1425, 2147483648
      %v1427 = vsel %vm1344, %v1426, %v1425
      %v1428 = vsub.s32 4, %v1404
      %v1429 = vsel %vm1344, %v1428, %v1404
      %v1430 = vsel %vm1343, %v1249, %v1427
      %v1431 = vsel %vm1343, 0, %v1429
      %v1432 = vcosq.f32.pop %v1430
      %v1433 = vsinq.f32.pop %v1430
      %vm1434 = vweird.f32 %v1249
      %v1435 = vadd.s32 %v1431, 3
      %v1436 = vand.u32 %v1435, 3
      %vm1437 = vcmp.lt.s32.totalorder %v1436, 2
      %vm1438 = vcmp.eq.s32.totalorder %v1436, 0
      %v1439 = vxor.u32 %v1433, 2147483648
      %v1440 = vsel %vm1438, %v1432, %v1439
      %vm1441 = vcmp.eq.s32.totalorder %v1436, 2
      %v1442 = vxor.u32 %v1432, 2147483648
      %v1443 = vsel %vm1441, %v1442, %v1433
      %v1444 = vsel %vm1437, %v1440, %v1443
      %v1445 = vsel %vm1434, nan, %v1444
      %v1446 = vand.u32 2147483647, %v1255
      %vm1447 = vcmp.le.f32.partialorder %v1446, 0.7853982
      %vm1448 = vcmp.lt.s32.totalorder %v1255, 0
      %v1449 = vand.u32 %v1255, 2139095040
      %v1450 = vshrl.u32 %v1449, 23
      %v1451 = vsub.s32 %v1450, 127
      %v1452 = vand.u32 2147483647, %v1255
      %v1453 = vand.u32 %v1452, 8388607
      %v1454 = vor.u32 %v1453, 8388608
      %v1455 = vsub.s32 0, %v1454
      %v1456 = vadd.s32 %v1451, 1
      %vm1457 = vcmp.gt.s32.totalorder %v1456, 0
      %v1458 = vsel %vm1457, %v1456, 0
      %v1459 = vshrl.u32 %v1458, 5
      %v1460 = vand.u32 %v1458, 31
      %v1461 = vsub.s32 32, %v1460
      %v1462 = vshrl.u32 683565275, %v1461
      %v1463 = vshll.u32 683565275, %v1460
      %v1464 = vshrl.u32 2475754826, %v1461
      %v1465 = vor.u32 %v1463, %v1464
      %v1466 = vshll.u32 2475754826, %v1460
      %v1467 = vshrl.u32 2131351028, %v1461
      %v1468 = vor.u32 %v1466, %v1467
      %v1469 = vshll.u32 2131351028, %v1460
      %v1470 = vshrl.u32 2102212464, %v1461
      %v1471 = vor.u32 %v1469, %v1470
      %v1472 = vshll.u32 2102212464, %v1460
      %v1473 = vshrl.u32 920167782, %v1461
      %v1474 = vor.u32 %v1472, %v1473
      %v1475 = vshll.u32 920167782, %v1460
      %v1476 = vshrl.u32 1326507024, %v1461
      %v1477 = vor.u32 %v1475, %v1476
      %vm1478 = vcmp.lt.s32.totalorder %v1459, 1
      %vm1479 = vcmp.lt.s32.totalorder %v1459, 2
      %vm1480 = vcmp.lt.s32.totalorder %v1459, 3
      %vm1481 = vcmp.lt.s32.totalorder %v1459, 4
      %v1482 = vsel %vm1478, %v1462, %v1465
      %v1483 = vsel %vm1481, %v1471, 2102212464
      %v1484 = vsel %vm1480, %v1468, %v1483
      %v1485 = vsel %vm1479, %v1482, %v1484
      %v1486 = vsel %vm1478, %v1465, %v1468
      %v1487 = vsel %vm1481, %v1474, 920167782
      %v1488 = vsel %vm1480, %v1471, %v1487
      %v1489 = vsel %vm1479, %v1486, %v1488
      %v1490 = vsel %vm1478, %v1468, %v1471
      %v1491 = vsel %vm1481, %v1477, 1326507024
      %v1492 = vsel %vm1480, %v1474, %v1491
      %v1493 = vsel %vm1479, %v1490, %v1492
      %v1494 = vshll.u32 %v1454, 8
      %v1495 = vmul.u32.u64.compose %v1494, %v1493
      %v1496 = vextract.low.u32 %v1495
      %v1497 = vextract.high.u32 %v1495
      %v1498 = vmul.u32.u64.compose %v1494, %v1489
      %v1499 = vextract.low.u32 %v1498
      %v1500 = vextract.high.u32 %v1498
      %v1501 = vmul.u32 %v1494, %v1485
      %v1502 = vadd.s32 %v1497, %v1499
      %vm1503 = vc.u32 %v1497, %v1499
      %v1504 = vadd.s32 %v1500, 1
      %v1505 = vsel %vm1503, %v1504, %v1500
      %v1506 = vadd.s32 %v1501, %v1505
      %v1507 = vadd.s32 %v1506, 536870912
      %v1508 = vshrl.u32 %v1507, 30
      %v1509 = vshll.u32 %v1508, 30
      %v1510 = vsub.s32 %v1506, %v1509
      %vm1511 = vcmp.lt.s32.totalorder %v1510, 0
      %v1512 = vsub.s32 0, %v1510
      %v1513 = vsel %vm1511, %v1512, %v1510
      %v1514 = vclz %v1513
      %v1515 = vsub.s32 %v1514, 2
      %vm1516 = vcmp.gt.s32.totalorder 0, %v1515
      %v1517 = vsel %vm1516, 0, %v1515
      %v1518 = vsub.s32 32, %v1517
      %v1519 = vshll.u32 %v1510, %v1517
      %v1520 = vshrl.u32 %v1502, %v1518
      %v1521 = vor.u32 %v1519, %v1520
      %v1522 = vsub.s32 4294967266, %v1517
      %v1523 = vadd.s32 %v1522, 127
      %v1524 = vshll.u32 %v1523, 23
      %v1525 = vor.u32 4788187, %v1524
      %v1526 = vand.u32 2147483647, %v1525
      %v1528 = vcvt.s32.f32 %v1521
      %v1529 = vmul.f32 %v1528, %v1526
      %v1530 = vxor.u32 %v1529, 2147483648
      %v1531 = vsel %vm1448, %v1530, %v1529
      %v1532 = vsub.s32 4, %v1508
      %v1533 = vsel %vm1448, %v1532, %v1508
      %v1534 = vsel %vm1447, %v1255, %v1531
      %v1535 = vsel %vm1447, 0, %v1533
      %v1536 = vcosq.f32.pop %v1534
      %v1537 = vsinq.f32.pop %v1534
      %vm1538 = vweird.f32 %v1255
      %v1539 = vadd.s32 %v1535, 3
      %v1540 = vand.u32 %v1539, 3
      %vm1541 = vcmp.lt.s32.totalorder %v1540, 2
      %vm1542 = vcmp.eq.s32.totalorder %v1540, 0
      %v1543 = vxor.u32 %v1537, 2147483648
      %v1544 = vsel %vm1542, %v1536, %v1543
      %vm1545 = vcmp.eq.s32.totalorder %v1540, 2
      %v1546 = vxor.u32 %v1536, 2147483648
      %v1547 = vsel %vm1545, %v1546, %v1537
      %v1548 = vsel %vm1541, %v1544, %v1547
      %v1549 = vsel %vm1538, nan, %v1548
      %v1550 = vand.u32 2147483647, %v1261
      %vm1551 = vcmp.le.f32.partialorder %v1550, 0.7853982
      %vm1552 = vcmp.lt.s32.totalorder %v1261, 0
      %v1553 = vand.u32 %v1261, 2139095040
      %v1554 = vshrl.u32 %v1553, 23
      %v1555 = vsub.s32 %v1554, 127
      %v1556 = vand.u32 2147483647, %v1261
      %v1557 = vand.u32 %v1556, 8388607
      %v1558 = vor.u32 %v1557, 8388608
      %v1559 = vsub.s32 0, %v1558
      %v1560 = vadd.s32 %v1555, 1
      %vm1561 = vcmp.gt.s32.totalorder %v1560, 0
      %v1562 = vsel %vm1561, %v1560, 0
      %v1563 = vshrl.u32 %v1562, 5
      %v1564 = vand.u32 %v1562, 31
      %v1565 = vsub.s32 32, %v1564
      %v1566 = vshrl.u32 683565275, %v1565
      %v1567 = vshll.u32 683565275, %v1564
      %v1568 = vshrl.u32 2475754826, %v1565
      %v1569 = vor.u32 %v1567, %v1568
      %v1570 = vshll.u32 2475754826, %v1564
      %v1571 = vshrl.u32 2131351028, %v1565
      %v1572 = vor.u32 %v1570, %v1571
      %v1573 = vshll.u32 2131351028, %v1564
      %v1574 = vshrl.u32 2102212464, %v1565
      %v1575 = vor.u32 %v1573, %v1574
      %v1576 = vshll.u32 2102212464, %v1564
      %v1577 = vshrl.u32 920167782, %v1565
      %v1578 = vor.u32 %v1576, %v1577
      %v1579 = vshll.u32 920167782, %v1564
      %v1580 = vshrl.u32 1326507024, %v1565
      %v1581 = vor.u32 %v1579, %v1580
      %vm1582 = vcmp.lt.s32.totalorder %v1563, 1
      %vm1583 = vcmp.lt.s32.totalorder %v1563, 2
      %vm1584 = vcmp.lt.s32.totalorder %v1563, 3
      %vm1585 = vcmp.lt.s32.totalorder %v1563, 4
      %v1586 = vsel %vm1582, %v1566, %v1569
      %v1587 = vsel %vm1585, %v1575, 2102212464
      %v1588 = vsel %vm1584, %v1572, %v1587
      %v1589 = vsel %vm1583, %v1586, %v1588
      %v1590 = vsel %vm1582, %v1569, %v1572
      %v1591 = vsel %vm1585, %v1578, 920167782
      %v1592 = vsel %vm1584, %v1575, %v1591
      %v1593 = vsel %vm1583, %v1590, %v1592
      %v1594 = vsel %vm1582, %v1572, %v1575
      %v1595 = vsel %vm1585, %v1581, 1326507024
      %v1596 = vsel %vm1584, %v1578, %v1595
      %v1597 = vsel %vm1583, %v1594, %v1596
      %v1598 = vshll.u32 %v1558, 8
      %v1599 = vmul.u32.u64.compose %v1598, %v1597
      %v1600 = vextract.low.u32 %v1599
      %v1601 = vextract.high.u32 %v1599
      %v1602 = vmul.u32.u64.compose %v1598, %v1593
      %v1603 = vextract.low.u32 %v1602
      %v1604 = vextract.high.u32 %v1602
      %v1605 = vmul.u32 %v1598, %v1589
      %v1606 = vadd.s32 %v1601, %v1603
      %vm1607 = vc.u32 %v1601, %v1603
      %v1608 = vadd.s32 %v1604, 1
      %v1609 = vsel %vm1607, %v1608, %v1604
      %v1610 = vadd.s32 %v1605, %v1609
      %v1611 = vadd.s32 %v1610, 536870912
      %v1612 = vshrl.u32 %v1611, 30
      %v1613 = vshll.u32 %v1612, 30
      %v1614 = vsub.s32 %v1610, %v1613
      %vm1615 = vcmp.lt.s32.totalorder %v1614, 0
      %v1616 = vsub.s32 0, %v1614
      %v1617 = vsel %vm1615, %v1616, %v1614
      %v1618 = vclz %v1617
      %v1619 = vsub.s32 %v1618, 2
      %vm1620 = vcmp.gt.s32.totalorder 0, %v1619
      %v1621 = vsel %vm1620, 0, %v1619
      %v1622 = vsub.s32 32, %v1621
      %v1623 = vshll.u32 %v1614, %v1621
      %v1624 = vshrl.u32 %v1606, %v1622
      %v1625 = vor.u32 %v1623, %v1624
      %v1626 = vsub.s32 4294967266, %v1621
      %v1627 = vadd.s32 %v1626, 127
      %v1628 = vshll.u32 %v1627, 23
      %v1629 = vor.u32 4788187, %v1628
      %v1630 = vand.u32 2147483647, %v1629
      %v1632 = vcvt.s32.f32 %v1625
      %v1633 = vmul.f32 %v1632, %v1630
      %v1634 = vxor.u32 %v1633, 2147483648
      %v1635 = vsel %vm1552, %v1634, %v1633
      %v1636 = vsub.s32 4, %v1612
      %v1637 = vsel %vm1552, %v1636, %v1612
      %v1638 = vsel %vm1551, %v1261, %v1635
      %v1639 = vsel %vm1551, 0, %v1637
      %v1640 = vcosq.f32.pop %v1638
      %v1641 = vsinq.f32.pop %v1638
      %vm1642 = vweird.f32 %v1261
      %v1643 = vadd.s32 %v1639, 3
      %v1644 = vand.u32 %v1643, 3
      %vm1645 = vcmp.lt.s32.totalorder %v1644, 2
      %vm1646 = vcmp.eq.s32.totalorder %v1644, 0
      %v1647 = vxor.u32 %v1641, 2147483648
      %v1648 = vsel %vm1646, %v1640, %v1647
      %vm1649 = vcmp.eq.s32.totalorder %v1644, 2
      %v1650 = vxor.u32 %v1640, 2147483648
      %v1651 = vsel %vm1649, %v1650, %v1641
      %v1652 = vsel %vm1645, %v1648, %v1651
      %v1653 = vsel %vm1642, nan, %v1652
      %v1654 = vand.u32 2147483647, %v1267
      %vm1655 = vcmp.le.f32.partialorder %v1654, 0.7853982
      %vm1656 = vcmp.lt.s32.totalorder %v1267, 0
      %v1657 = vand.u32 %v1267, 2139095040
      %v1658 = vshrl.u32 %v1657, 23
      %v1659 = vsub.s32 %v1658, 127
      %v1660 = vand.u32 2147483647, %v1267
      %v1661 = vand.u32 %v1660, 8388607
      %v1662 = vor.u32 %v1661, 8388608
      %v1663 = vsub.s32 0, %v1662
      %v1664 = vadd.s32 %v1659, 1
      %vm1665 = vcmp.gt.s32.totalorder %v1664, 0
      %v1666 = vsel %vm1665, %v1664, 0
      %v1667 = vshrl.u32 %v1666, 5
      %v1668 = vand.u32 %v1666, 31
      %v1669 = vsub.s32 32, %v1668
      %v1670 = vshrl.u32 683565275, %v1669
      %v1671 = vshll.u32 683565275, %v1668
      %v1672 = vshrl.u32 2475754826, %v1669
      %v1673 = vor.u32 %v1671, %v1672
      %v1674 = vshll.u32 2475754826, %v1668
      %v1675 = vshrl.u32 2131351028, %v1669
      %v1676 = vor.u32 %v1674, %v1675
      %v1677 = vshll.u32 2131351028, %v1668
      %v1678 = vshrl.u32 2102212464, %v1669
      %v1679 = vor.u32 %v1677, %v1678
      %v1680 = vshll.u32 2102212464, %v1668
      %v1681 = vshrl.u32 920167782, %v1669
      %v1682 = vor.u32 %v1680, %v1681
      %v1683 = vshll.u32 920167782, %v1668
      %v1684 = vshrl.u32 1326507024, %v1669
      %v1685 = vor.u32 %v1683, %v1684
      %vm1686 = vcmp.lt.s32.totalorder %v1667, 1
      %vm1687 = vcmp.lt.s32.totalorder %v1667, 2
      %vm1688 = vcmp.lt.s32.totalorder %v1667, 3
      %vm1689 = vcmp.lt.s32.totalorder %v1667, 4
      %v1690 = vsel %vm1686, %v1670, %v1673
      %v1691 = vsel %vm1689, %v1679, 2102212464
      %v1692 = vsel %vm1688, %v1676, %v1691
      %v1693 = vsel %vm1687, %v1690, %v1692
      %v1694 = vsel %vm1686, %v1673, %v1676
      %v1695 = vsel %vm1689, %v1682, 920167782
      %v1696 = vsel %vm1688, %v1679, %v1695
      %v1697 = vsel %vm1687, %v1694, %v1696
      %v1698 = vsel %vm1686, %v1676, %v1679
      %v1699 = vsel %vm1689, %v1685, 1326507024
      %v1700 = vsel %vm1688, %v1682, %v1699
      %v1701 = vsel %vm1687, %v1698, %v1700
      %v1702 = vshll.u32 %v1662, 8
      %v1703 = vmul.u32.u64.compose %v1702, %v1701
      %v1704 = vextract.low.u32 %v1703
      %v1705 = vextract.high.u32 %v1703
      %v1706 = vmul.u32.u64.compose %v1702, %v1697
      %v1707 = vextract.low.u32 %v1706
      %v1708 = vextract.high.u32 %v1706
      %v1709 = vmul.u32 %v1702, %v1693
      %v1710 = vadd.s32 %v1705, %v1707
      %vm1711 = vc.u32 %v1705, %v1707
      %v1712 = vadd.s32 %v1708, 1
      %v1713 = vsel %vm1711, %v1712, %v1708
      %v1714 = vadd.s32 %v1709, %v1713
      %v1715 = vadd.s32 %v1714, 536870912
      %v1716 = vshrl.u32 %v1715, 30
      %v1717 = vshll.u32 %v1716, 30
      %v1718 = vsub.s32 %v1714, %v1717
      %vm1719 = vcmp.lt.s32.totalorder %v1718, 0
      %v1720 = vsub.s32 0, %v1718
      %v1721 = vsel %vm1719, %v1720, %v1718
      %v1722 = vclz %v1721
      %v1723 = vsub.s32 %v1722, 2
      %vm1724 = vcmp.gt.s32.totalorder 0, %v1723
      %v1725 = vsel %vm1724, 0, %v1723
      %v1726 = vsub.s32 32, %v1725
      %v1727 = vshll.u32 %v1718, %v1725
      %v1728 = vshrl.u32 %v1710, %v1726
      %v1729 = vor.u32 %v1727, %v1728
      %v1730 = vsub.s32 4294967266, %v1725
      %v1731 = vadd.s32 %v1730, 127
      %v1732 = vshll.u32 %v1731, 23
      %v1733 = vor.u32 4788187, %v1732
      %v1734 = vand.u32 2147483647, %v1733
      %v1736 = vcvt.s32.f32 %v1729
      %v1737 = vmul.f32 %v1736, %v1734
      %v1738 = vxor.u32 %v1737, 2147483648
      %v1739 = vsel %vm1656, %v1738, %v1737
      %v1740 = vsub.s32 4, %v1716
      %v1741 = vsel %vm1656, %v1740, %v1716
      %v1742 = vsel %vm1655, %v1267, %v1739
      %v1743 = vsel %vm1655, 0, %v1741
      %v1744 = vcosq.f32.pop %v1742
      %v1745 = vsinq.f32.pop %v1742
      %vm1746 = vweird.f32 %v1267
      %v1747 = vadd.s32 %v1743, 3
      %v1748 = vand.u32 %v1747, 3
      %vm1749 = vcmp.lt.s32.totalorder %v1748, 2
      %vm1750 = vcmp.eq.s32.totalorder %v1748, 0
      %v1751 = vxor.u32 %v1745, 2147483648
      %v1752 = vsel %vm1750, %v1744, %v1751
      %vm1753 = vcmp.eq.s32.totalorder %v1748, 2
      %v1754 = vxor.u32 %v1744, 2147483648
      %v1755 = vsel %vm1753, %v1754, %v1745
      %v1756 = vsel %vm1749, %v1752, %v1755
      %v1757 = vsel %vm1746, nan, %v1756
      %v1758 = vand.u32 2147483647, %v1273
      %vm1759 = vcmp.le.f32.partialorder %v1758, 0.7853982
      %vm1760 = vcmp.lt.s32.totalorder %v1273, 0
      %v1761 = vand.u32 %v1273, 2139095040
      %v1762 = vshrl.u32 %v1761, 23
      %v1763 = vsub.s32 %v1762, 127
      %v1764 = vand.u32 2147483647, %v1273
      %v1765 = vand.u32 %v1764, 8388607
      %v1766 = vor.u32 %v1765, 8388608
      %v1767 = vsub.s32 0, %v1766
      %v1768 = vadd.s32 %v1763, 1
      %vm1769 = vcmp.gt.s32.totalorder %v1768, 0
      %v1770 = vsel %vm1769, %v1768, 0
      %v1771 = vshrl.u32 %v1770, 5
      %v1772 = vand.u32 %v1770, 31
      %v1773 = vsub.s32 32, %v1772
      %v1774 = vshrl.u32 683565275, %v1773
      %v1775 = vshll.u32 683565275, %v1772
      %v1776 = vshrl.u32 2475754826, %v1773
      %v1777 = vor.u32 %v1775, %v1776
      %v1778 = vshll.u32 2475754826, %v1772
      %v1779 = vshrl.u32 2131351028, %v1773
      %v1780 = vor.u32 %v1778, %v1779
      %v1781 = vshll.u32 2131351028, %v1772
      %v1782 = vshrl.u32 2102212464, %v1773
      %v1783 = vor.u32 %v1781, %v1782
      %v1784 = vshll.u32 2102212464, %v1772
      %v1785 = vshrl.u32 920167782, %v1773
      %v1786 = vor.u32 %v1784, %v1785
      %v1787 = vshll.u32 920167782, %v1772
      %v1788 = vshrl.u32 1326507024, %v1773
      %v1789 = vor.u32 %v1787, %v1788
      %vm1790 = vcmp.lt.s32.totalorder %v1771, 1
      %vm1791 = vcmp.lt.s32.totalorder %v1771, 2
      %vm1792 = vcmp.lt.s32.totalorder %v1771, 3
      %vm1793 = vcmp.lt.s32.totalorder %v1771, 4
      %v1794 = vsel %vm1790, %v1774, %v1777
      %v1795 = vsel %vm1793, %v1783, 2102212464
      %v1796 = vsel %vm1792, %v1780, %v1795
      %v1797 = vsel %vm1791, %v1794, %v1796
      %v1798 = vsel %vm1790, %v1777, %v1780
      %v1799 = vsel %vm1793, %v1786, 920167782
      %v1800 = vsel %vm1792, %v1783, %v1799
      %v1801 = vsel %vm1791, %v1798, %v1800
      %v1802 = vsel %vm1790, %v1780, %v1783
      %v1803 = vsel %vm1793, %v1789, 1326507024
      %v1804 = vsel %vm1792, %v1786, %v1803
      %v1805 = vsel %vm1791, %v1802, %v1804
      %v1806 = vshll.u32 %v1766, 8
      %v1807 = vmul.u32.u64.compose %v1806, %v1805
      %v1808 = vextract.low.u32 %v1807
      %v1809 = vextract.high.u32 %v1807
      %v1810 = vmul.u32.u64.compose %v1806, %v1801
      %v1811 = vextract.low.u32 %v1810
      %v1812 = vextract.high.u32 %v1810
      %v1813 = vmul.u32 %v1806, %v1797
      %v1814 = vadd.s32 %v1809, %v1811
      %vm1815 = vc.u32 %v1809, %v1811
      %v1816 = vadd.s32 %v1812, 1
      %v1817 = vsel %vm1815, %v1816, %v1812
      %v1818 = vadd.s32 %v1813, %v1817
      %v1819 = vadd.s32 %v1818, 536870912
      %v1820 = vshrl.u32 %v1819, 30
      %v1821 = vshll.u32 %v1820, 30
      %v1822 = vsub.s32 %v1818, %v1821
      %vm1823 = vcmp.lt.s32.totalorder %v1822, 0
      %v1824 = vsub.s32 0, %v1822
      %v1825 = vsel %vm1823, %v1824, %v1822
      %v1826 = vclz %v1825
      %v1827 = vsub.s32 %v1826, 2
      %vm1828 = vcmp.gt.s32.totalorder 0, %v1827
      %v1829 = vsel %vm1828, 0, %v1827
      %v1830 = vsub.s32 32, %v1829
      %v1831 = vshll.u32 %v1822, %v1829
      %v1832 = vshrl.u32 %v1814, %v1830
      %v1833 = vor.u32 %v1831, %v1832
      %v1834 = vsub.s32 4294967266, %v1829
      %v1835 = vadd.s32 %v1834, 127
      %v1836 = vshll.u32 %v1835, 23
      %v1837 = vor.u32 4788187, %v1836
      %v1838 = vand.u32 2147483647, %v1837
      %v1840 = vcvt.s32.f32 %v1833
      %v1841 = vmul.f32 %v1840, %v1838
      %v1842 = vxor.u32 %v1841, 2147483648
      %v1843 = vsel %vm1760, %v1842, %v1841
      %v1844 = vsub.s32 4, %v1820
      %v1845 = vsel %vm1760, %v1844, %v1820
      %v1846 = vsel %vm1759, %v1273, %v1843
      %v1847 = vsel %vm1759, 0, %v1845
      %v1848 = vcosq.f32.pop %v1846
      %v1849 = vsinq.f32.pop %v1846
      %vm1850 = vweird.f32 %v1273
      %v1851 = vadd.s32 %v1847, 3
      %v1852 = vand.u32 %v1851, 3
      %vm1853 = vcmp.lt.s32.totalorder %v1852, 2
      %vm1854 = vcmp.eq.s32.totalorder %v1852, 0
      %v1855 = vxor.u32 %v1849, 2147483648
      %v1856 = vsel %vm1854, %v1848, %v1855
      %vm1857 = vcmp.eq.s32.totalorder %v1852, 2
      %v1858 = vxor.u32 %v1848, 2147483648
      %v1859 = vsel %vm1857, %v1858, %v1849
      %v1860 = vsel %vm1853, %v1856, %v1859
      %v1861 = vsel %vm1850, nan, %v1860
      %v1862 = vand.u32 2147483647, %v1279
      %vm1863 = vcmp.le.f32.partialorder %v1862, 0.7853982
      %vm1864 = vcmp.lt.s32.totalorder %v1279, 0
      %v1865 = vand.u32 %v1279, 2139095040
      %v1866 = vshrl.u32 %v1865, 23
      %v1867 = vsub.s32 %v1866, 127
      %v1868 = vand.u32 2147483647, %v1279
      %v1869 = vand.u32 %v1868, 8388607
      %v1870 = vor.u32 %v1869, 8388608
      %v1871 = vsub.s32 0, %v1870
      %v1872 = vadd.s32 %v1867, 1
      %vm1873 = vcmp.gt.s32.totalorder %v1872, 0
      %v1874 = vsel %vm1873, %v1872, 0
      %v1875 = vshrl.u32 %v1874, 5
      %v1876 = vand.u32 %v1874, 31
      %v1877 = vsub.s32 32, %v1876
      %v1878 = vshrl.u32 683565275, %v1877
      %v1879 = vshll.u32 683565275, %v1876
      %v1880 = vshrl.u32 2475754826, %v1877
      %v1881 = vor.u32 %v1879, %v1880
      %v1882 = vshll.u32 2475754826, %v1876
      %v1883 = vshrl.u32 2131351028, %v1877
      %v1884 = vor.u32 %v1882, %v1883
      %v1885 = vshll.u32 2131351028, %v1876
      %v1886 = vshrl.u32 2102212464, %v1877
      %v1887 = vor.u32 %v1885, %v1886
      %v1888 = vshll.u32 2102212464, %v1876
      %v1889 = vshrl.u32 920167782, %v1877
      %v1890 = vor.u32 %v1888, %v1889
      %v1891 = vshll.u32 920167782, %v1876
      %v1892 = vshrl.u32 1326507024, %v1877
      %v1893 = vor.u32 %v1891, %v1892
      %vm1894 = vcmp.lt.s32.totalorder %v1875, 1
      %vm1895 = vcmp.lt.s32.totalorder %v1875, 2
      %vm1896 = vcmp.lt.s32.totalorder %v1875, 3
      %vm1897 = vcmp.lt.s32.totalorder %v1875, 4
      %v1898 = vsel %vm1894, %v1878, %v1881
      %v1899 = vsel %vm1897, %v1887, 2102212464
      %v1900 = vsel %vm1896, %v1884, %v1899
      %v1901 = vsel %vm1895, %v1898, %v1900
      %v1902 = vsel %vm1894, %v1881, %v1884
      %v1903 = vsel %vm1897, %v1890, 920167782
      %v1904 = vsel %vm1896, %v1887, %v1903
      %v1905 = vsel %vm1895, %v1902, %v1904
      %v1906 = vsel %vm1894, %v1884, %v1887
      %v1907 = vsel %vm1897, %v1893, 1326507024
      %v1908 = vsel %vm1896, %v1890, %v1907
      %v1909 = vsel %vm1895, %v1906, %v1908
      %v1910 = vshll.u32 %v1870, 8
      %v1911 = vmul.u32.u64.compose %v1910, %v1909
      %v1912 = vextract.low.u32 %v1911
      %v1913 = vextract.high.u32 %v1911
      %v1914 = vmul.u32.u64.compose %v1910, %v1905
      %v1915 = vextract.low.u32 %v1914
      %v1916 = vextract.high.u32 %v1914
      %v1917 = vmul.u32 %v1910, %v1901
      %v1918 = vadd.s32 %v1913, %v1915
      %vm1919 = vc.u32 %v1913, %v1915
      %v1920 = vadd.s32 %v1916, 1
      %v1921 = vsel %vm1919, %v1920, %v1916
      %v1922 = vadd.s32 %v1917, %v1921
      %v1923 = vadd.s32 %v1922, 536870912
      %v1924 = vshrl.u32 %v1923, 30
      %v1925 = vshll.u32 %v1924, 30
      %v1926 = vsub.s32 %v1922, %v1925
      %vm1927 = vcmp.lt.s32.totalorder %v1926, 0
      %v1928 = vsub.s32 0, %v1926
      %v1929 = vsel %vm1927, %v1928, %v1926
      %v1930 = vclz %v1929
      %v1931 = vsub.s32 %v1930, 2
      %vm1932 = vcmp.gt.s32.totalorder 0, %v1931
      %v1933 = vsel %vm1932, 0, %v1931
      %v1934 = vsub.s32 32, %v1933
      %v1935 = vshll.u32 %v1926, %v1933
      %v1936 = vshrl.u32 %v1918, %v1934
      %v1937 = vor.u32 %v1935, %v1936
      %v1938 = vsub.s32 4294967266, %v1933
      %v1939 = vadd.s32 %v1938, 127
      %v1940 = vshll.u32 %v1939, 23
      %v1941 = vor.u32 4788187, %v1940
      %v1942 = vand.u32 2147483647, %v1941
      %v1944 = vcvt.s32.f32 %v1937
      %v1945 = vmul.f32 %v1944, %v1942
      %v1946 = vxor.u32 %v1945, 2147483648
      %v1947 = vsel %vm1864, %v1946, %v1945
      %v1948 = vsub.s32 4, %v1924
      %v1949 = vsel %vm1864, %v1948, %v1924
      %v1950 = vsel %vm1863, %v1279, %v1947
      %v1951 = vsel %vm1863, 0, %v1949
      %v1952 = vcosq.f32.pop %v1950
      %v1953 = vsinq.f32.pop %v1950
      %vm1954 = vweird.f32 %v1279
      %v1955 = vadd.s32 %v1951, 3
      %v1956 = vand.u32 %v1955, 3
      %vm1957 = vcmp.lt.s32.totalorder %v1956, 2
      %vm1958 = vcmp.eq.s32.totalorder %v1956, 0
      %v1959 = vxor.u32 %v1953, 2147483648
      %v1960 = vsel %vm1958, %v1952, %v1959
      %vm1961 = vcmp.eq.s32.totalorder %v1956, 2
      %v1962 = vxor.u32 %v1952, 2147483648
      %v1963 = vsel %vm1961, %v1962, %v1953
      %v1964 = vsel %vm1957, %v1960, %v1963
      %v1965 = vsel %vm1954, nan, %v1964
      %v1966 = vand.u32 2147483647, %v1285
      %vm1967 = vcmp.le.f32.partialorder %v1966, 0.7853982
      %vm1968 = vcmp.lt.s32.totalorder %v1285, 0
      %v1969 = vand.u32 %v1285, 2139095040
      %v1970 = vshrl.u32 %v1969, 23
      %v1971 = vsub.s32 %v1970, 127
      %v1972 = vand.u32 2147483647, %v1285
      %v1973 = vand.u32 %v1972, 8388607
      %v1974 = vor.u32 %v1973, 8388608
      %v1975 = vsub.s32 0, %v1974
      %v1976 = vadd.s32 %v1971, 1
      %vm1977 = vcmp.gt.s32.totalorder %v1976, 0
      %v1978 = vsel %vm1977, %v1976, 0
      %v1979 = vshrl.u32 %v1978, 5
      %v1980 = vand.u32 %v1978, 31
      %v1981 = vsub.s32 32, %v1980
      %v1982 = vshrl.u32 683565275, %v1981
      %v1983 = vshll.u32 683565275, %v1980
      %v1984 = vshrl.u32 2475754826, %v1981
      %v1985 = vor.u32 %v1983, %v1984
      %v1986 = vshll.u32 2475754826, %v1980
      %v1987 = vshrl.u32 2131351028, %v1981
      %v1988 = vor.u32 %v1986, %v1987
      %v1989 = vshll.u32 2131351028, %v1980
      %v1990 = vshrl.u32 2102212464, %v1981
      %v1991 = vor.u32 %v1989, %v1990
      %v1992 = vshll.u32 2102212464, %v1980
      %v1993 = vshrl.u32 920167782, %v1981
      %v1994 = vor.u32 %v1992, %v1993
      %v1995 = vshll.u32 920167782, %v1980
      %v1996 = vshrl.u32 1326507024, %v1981
      %v1997 = vor.u32 %v1995, %v1996
      %vm1998 = vcmp.lt.s32.totalorder %v1979, 1
      %vm1999 = vcmp.lt.s32.totalorder %v1979, 2
      %vm2000 = vcmp.lt.s32.totalorder %v1979, 3
      %vm2001 = vcmp.lt.s32.totalorder %v1979, 4
      %v2002 = vsel %vm1998, %v1982, %v1985
      %v2003 = vsel %vm2001, %v1991, 2102212464
      %v2004 = vsel %vm2000, %v1988, %v2003
      %v2005 = vsel %vm1999, %v2002, %v2004
      %v2006 = vsel %vm1998, %v1985, %v1988
      %v2007 = vsel %vm2001, %v1994, 920167782
      %v2008 = vsel %vm2000, %v1991, %v2007
      %v2009 = vsel %vm1999, %v2006, %v2008
      %v2010 = vsel %vm1998, %v1988, %v1991
      %v2011 = vsel %vm2001, %v1997, 1326507024
      %v2012 = vsel %vm2000, %v1994, %v2011
      %v2013 = vsel %vm1999, %v2010, %v2012
      %v2014 = vshll.u32 %v1974, 8
      %v2015 = vmul.u32.u64.compose %v2014, %v2013
      %v2016 = vextract.low.u32 %v2015
      %v2017 = vextract.high.u32 %v2015
      %v2018 = vmul.u32.u64.compose %v2014, %v2009
      %v2019 = vextract.low.u32 %v2018
      %v2020 = vextract.high.u32 %v2018
      %v2021 = vmul.u32 %v2014, %v2005
      %v2022 = vadd.s32 %v2017, %v2019
      %vm2023 = vc.u32 %v2017, %v2019
      %v2024 = vadd.s32 %v2020, 1
      %v2025 = vsel %vm2023, %v2024, %v2020
      %v2026 = vadd.s32 %v2021, %v2025
      %v2027 = vadd.s32 %v2026, 536870912
      %v2028 = vshrl.u32 %v2027, 30
      %v2029 = vshll.u32 %v2028, 30
      %v2030 = vsub.s32 %v2026, %v2029
      %vm2031 = vcmp.lt.s32.totalorder %v2030, 0
      %v2032 = vsub.s32 0, %v2030
      %v2033 = vsel %vm2031, %v2032, %v2030
      %v2034 = vclz %v2033
      %v2035 = vsub.s32 %v2034, 2
      %vm2036 = vcmp.gt.s32.totalorder 0, %v2035
      %v2037 = vsel %vm2036, 0, %v2035
      %v2038 = vsub.s32 32, %v2037
      %v2039 = vshll.u32 %v2030, %v2037
      %v2040 = vshrl.u32 %v2022, %v2038
      %v2041 = vor.u32 %v2039, %v2040
      %v2042 = vsub.s32 4294967266, %v2037
      %v2043 = vadd.s32 %v2042, 127
      %v2044 = vshll.u32 %v2043, 23
      %v2045 = vor.u32 4788187, %v2044
      %v2046 = vand.u32 2147483647, %v2045
      %v2048 = vcvt.s32.f32 %v2041
      %v2049 = vmul.f32 %v2048, %v2046
      %v2050 = vxor.u32 %v2049, 2147483648
      %v2051 = vsel %vm1968, %v2050, %v2049
      %v2052 = vsub.s32 4, %v2028
      %v2053 = vsel %vm1968, %v2052, %v2028
      %v2054 = vsel %vm1967, %v1285, %v2051
      %v2055 = vsel %vm1967, 0, %v2053
      %v2056 = vcosq.f32.pop %v2054
      %v2057 = vsinq.f32.pop %v2054
      %vm2058 = vweird.f32 %v1285
      %v2059 = vadd.s32 %v2055, 3
      %v2060 = vand.u32 %v2059, 3
      %vm2061 = vcmp.lt.s32.totalorder %v2060, 2
      %vm2062 = vcmp.eq.s32.totalorder %v2060, 0
      %v2063 = vxor.u32 %v2057, 2147483648
      %v2064 = vsel %vm2062, %v2056, %v2063
      %vm2065 = vcmp.eq.s32.totalorder %v2060, 2
      %v2066 = vxor.u32 %v2056, 2147483648
      %v2067 = vsel %vm2065, %v2066, %v2057
      %v2068 = vsel %vm2061, %v2064, %v2067
      %v2069 = vsel %vm2058, nan, %v2068
      %v2070 = vand.u32 2147483647, %v1291
      %vm2071 = vcmp.le.f32.partialorder %v2070, 0.7853982
      %vm2072 = vcmp.lt.s32.totalorder %v1291, 0
      %v2073 = vand.u32 %v1291, 2139095040
      %v2074 = vshrl.u32 %v2073, 23
      %v2075 = vsub.s32 %v2074, 127
      %v2076 = vand.u32 2147483647, %v1291
      %v2077 = vand.u32 %v2076, 8388607
      %v2078 = vor.u32 %v2077, 8388608
      %v2079 = vsub.s32 0, %v2078
      %v2080 = vadd.s32 %v2075, 1
      %vm2081 = vcmp.gt.s32.totalorder %v2080, 0
      %v2082 = vsel %vm2081, %v2080, 0
      %v2083 = vshrl.u32 %v2082, 5
      %v2084 = vand.u32 %v2082, 31
      %v2085 = vsub.s32 32, %v2084
      %v2086 = vshrl.u32 683565275, %v2085
      %v2087 = vshll.u32 683565275, %v2084
      %v2088 = vshrl.u32 2475754826, %v2085
      %v2089 = vor.u32 %v2087, %v2088
      %v2090 = vshll.u32 2475754826, %v2084
      %v2091 = vshrl.u32 2131351028, %v2085
      %v2092 = vor.u32 %v2090, %v2091
      %v2093 = vshll.u32 2131351028, %v2084
      %v2094 = vshrl.u32 2102212464, %v2085
      %v2095 = vor.u32 %v2093, %v2094
      %v2096 = vshll.u32 2102212464, %v2084
      %v2097 = vshrl.u32 920167782, %v2085
      %v2098 = vor.u32 %v2096, %v2097
      %v2099 = vshll.u32 920167782, %v2084
      %v2100 = vshrl.u32 1326507024, %v2085
      %v2101 = vor.u32 %v2099, %v2100
      %vm2102 = vcmp.lt.s32.totalorder %v2083, 1
      %vm2103 = vcmp.lt.s32.totalorder %v2083, 2
      %vm2104 = vcmp.lt.s32.totalorder %v2083, 3
      %vm2105 = vcmp.lt.s32.totalorder %v2083, 4
      %v2106 = vsel %vm2102, %v2086, %v2089
      %v2107 = vsel %vm2105, %v2095, 2102212464
      %v2108 = vsel %vm2104, %v2092, %v2107
      %v2109 = vsel %vm2103, %v2106, %v2108
      %v2110 = vsel %vm2102, %v2089, %v2092
      %v2111 = vsel %vm2105, %v2098, 920167782
      %v2112 = vsel %vm2104, %v2095, %v2111
      %v2113 = vsel %vm2103, %v2110, %v2112
      %v2114 = vsel %vm2102, %v2092, %v2095
      %v2115 = vsel %vm2105, %v2101, 1326507024
      %v2116 = vsel %vm2104, %v2098, %v2115
      %v2117 = vsel %vm2103, %v2114, %v2116
      %v2118 = vshll.u32 %v2078, 8
      %v2119 = vmul.u32.u64.compose %v2118, %v2117
      %v2120 = vextract.low.u32 %v2119
      %v2121 = vextract.high.u32 %v2119
      %v2122 = vmul.u32.u64.compose %v2118, %v2113
      %v2123 = vextract.low.u32 %v2122
      %v2124 = vextract.high.u32 %v2122
      %v2125 = vmul.u32 %v2118, %v2109
      %v2126 = vadd.s32 %v2121, %v2123
      %vm2127 = vc.u32 %v2121, %v2123
      %v2128 = vadd.s32 %v2124, 1
      %v2129 = vsel %vm2127, %v2128, %v2124
      %v2130 = vadd.s32 %v2125, %v2129
      %v2131 = vadd.s32 %v2130, 536870912
      %v2132 = vshrl.u32 %v2131, 30
      %v2133 = vshll.u32 %v2132, 30
      %v2134 = vsub.s32 %v2130, %v2133
      %vm2135 = vcmp.lt.s32.totalorder %v2134, 0
      %v2136 = vsub.s32 0, %v2134
      %v2137 = vsel %vm2135, %v2136, %v2134
      %v2138 = vclz %v2137
      %v2139 = vsub.s32 %v2138, 2
      %vm2140 = vcmp.gt.s32.totalorder 0, %v2139
      %v2141 = vsel %vm2140, 0, %v2139
      %v2142 = vsub.s32 32, %v2141
      %v2143 = vshll.u32 %v2134, %v2141
      %v2144 = vshrl.u32 %v2126, %v2142
      %v2145 = vor.u32 %v2143, %v2144
      %v2146 = vsub.s32 4294967266, %v2141
      %v2147 = vadd.s32 %v2146, 127
      %v2148 = vshll.u32 %v2147, 23
      %v2149 = vor.u32 4788187, %v2148
      %v2150 = vand.u32 2147483647, %v2149
      %v2152 = vcvt.s32.f32 %v2145
      %v2153 = vmul.f32 %v2152, %v2150
      %v2154 = vxor.u32 %v2153, 2147483648
      %v2155 = vsel %vm2072, %v2154, %v2153
      %v2156 = vsub.s32 4, %v2132
      %v2157 = vsel %vm2072, %v2156, %v2132
      %v2158 = vsel %vm2071, %v1291, %v2155
      %v2159 = vsel %vm2071, 0, %v2157
      %v2160 = vcosq.f32.pop %v2158
      %v2161 = vsinq.f32.pop %v2158
      %vm2162 = vweird.f32 %v1291
      %v2163 = vadd.s32 %v2159, 3
      %v2164 = vand.u32 %v2163, 3
      %vm2165 = vcmp.lt.s32.totalorder %v2164, 2
      %vm2166 = vcmp.eq.s32.totalorder %v2164, 0
      %v2167 = vxor.u32 %v2161, 2147483648
      %v2168 = vsel %vm2166, %v2160, %v2167
      %vm2169 = vcmp.eq.s32.totalorder %v2164, 2
      %v2170 = vxor.u32 %v2160, 2147483648
      %v2171 = vsel %vm2169, %v2170, %v2161
      %v2172 = vsel %vm2165, %v2168, %v2171
      %v2173 = vsel %vm2162, nan, %v2172
      %v2174 = vand.u32 2147483647, %v1297
      %vm2175 = vcmp.le.f32.partialorder %v2174, 0.7853982
      %vm2176 = vcmp.lt.s32.totalorder %v1297, 0
      %v2177 = vand.u32 %v1297, 2139095040
      %v2178 = vshrl.u32 %v2177, 23
      %v2179 = vsub.s32 %v2178, 127
      %v2180 = vand.u32 2147483647, %v1297
      %v2181 = vand.u32 %v2180, 8388607
      %v2182 = vor.u32 %v2181, 8388608
      %v2183 = vsub.s32 0, %v2182
      %v2184 = vadd.s32 %v2179, 1
      %vm2185 = vcmp.gt.s32.totalorder %v2184, 0
      %v2186 = vsel %vm2185, %v2184, 0
      %v2187 = vshrl.u32 %v2186, 5
      %v2188 = vand.u32 %v2186, 31
      %v2189 = vsub.s32 32, %v2188
      %v2190 = vshrl.u32 683565275, %v2189
      %v2191 = vshll.u32 683565275, %v2188
      %v2192 = vshrl.u32 2475754826, %v2189
      %v2193 = vor.u32 %v2191, %v2192
      %v2194 = vshll.u32 2475754826, %v2188
      %v2195 = vshrl.u32 2131351028, %v2189
      %v2196 = vor.u32 %v2194, %v2195
      %v2197 = vshll.u32 2131351028, %v2188
      %v2198 = vshrl.u32 2102212464, %v2189
      %v2199 = vor.u32 %v2197, %v2198
      %v2200 = vshll.u32 2102212464, %v2188
      %v2201 = vshrl.u32 920167782, %v2189
      %v2202 = vor.u32 %v2200, %v2201
      %v2203 = vshll.u32 920167782, %v2188
      %v2204 = vshrl.u32 1326507024, %v2189
      %v2205 = vor.u32 %v2203, %v2204
      %vm2206 = vcmp.lt.s32.totalorder %v2187, 1
      %vm2207 = vcmp.lt.s32.totalorder %v2187, 2
      %vm2208 = vcmp.lt.s32.totalorder %v2187, 3
      %vm2209 = vcmp.lt.s32.totalorder %v2187, 4
      %v2210 = vsel %vm2206, %v2190, %v2193
      %v2211 = vsel %vm2209, %v2199, 2102212464
      %v2212 = vsel %vm2208, %v2196, %v2211
      %v2213 = vsel %vm2207, %v2210, %v2212
      %v2214 = vsel %vm2206, %v2193, %v2196
      %v2215 = vsel %vm2209, %v2202, 920167782
      %v2216 = vsel %vm2208, %v2199, %v2215
      %v2217 = vsel %vm2207, %v2214, %v2216
      %v2218 = vsel %vm2206, %v2196, %v2199
      %v2219 = vsel %vm2209, %v2205, 1326507024
      %v2220 = vsel %vm2208, %v2202, %v2219
      %v2221 = vsel %vm2207, %v2218, %v2220
      %v2222 = vshll.u32 %v2182, 8
      %v2223 = vmul.u32.u64.compose %v2222, %v2221
      %v2224 = vextract.low.u32 %v2223
      %v2225 = vextract.high.u32 %v2223
      %v2226 = vmul.u32.u64.compose %v2222, %v2217
      %v2227 = vextract.low.u32 %v2226
      %v2228 = vextract.high.u32 %v2226
      %v2229 = vmul.u32 %v2222, %v2213
      %v2230 = vadd.s32 %v2225, %v2227
      %vm2231 = vc.u32 %v2225, %v2227
      %v2232 = vadd.s32 %v2228, 1
      %v2233 = vsel %vm2231, %v2232, %v2228
      %v2234 = vadd.s32 %v2229, %v2233
      %v2235 = vadd.s32 %v2234, 536870912
      %v2236 = vshrl.u32 %v2235, 30
      %v2237 = vshll.u32 %v2236, 30
      %v2238 = vsub.s32 %v2234, %v2237
      %vm2239 = vcmp.lt.s32.totalorder %v2238, 0
      %v2240 = vsub.s32 0, %v2238
      %v2241 = vsel %vm2239, %v2240, %v2238
      %v2242 = vclz %v2241
      %v2243 = vsub.s32 %v2242, 2
      %vm2244 = vcmp.gt.s32.totalorder 0, %v2243
      %v2245 = vsel %vm2244, 0, %v2243
      %v2246 = vsub.s32 32, %v2245
      %v2247 = vshll.u32 %v2238, %v2245
      %v2248 = vshrl.u32 %v2230, %v2246
      %v2249 = vor.u32 %v2247, %v2248
      %v2250 = vsub.s32 4294967266, %v2245
      %v2251 = vadd.s32 %v2250, 127
      %v2252 = vshll.u32 %v2251, 23
      %v2253 = vor.u32 4788187, %v2252
      %v2254 = vand.u32 2147483647, %v2253
      %v2256 = vcvt.s32.f32 %v2249
      %v2257 = vmul.f32 %v2256, %v2254
      %v2258 = vxor.u32 %v2257, 2147483648
      %v2259 = vsel %vm2176, %v2258, %v2257
      %v2260 = vsub.s32 4, %v2236
      %v2261 = vsel %vm2176, %v2260, %v2236
      %v2262 = vsel %vm2175, %v1297, %v2259
      %v2263 = vsel %vm2175, 0, %v2261
      %v2264 = vcosq.f32.pop %v2262
      %v2265 = vsinq.f32.pop %v2262
      %vm2266 = vweird.f32 %v1297
      %v2267 = vadd.s32 %v2263, 3
      %v2268 = vand.u32 %v2267, 3
      %vm2269 = vcmp.lt.s32.totalorder %v2268, 2
      %vm2270 = vcmp.eq.s32.totalorder %v2268, 0
      %v2271 = vxor.u32 %v2265, 2147483648
      %v2272 = vsel %vm2270, %v2264, %v2271
      %vm2273 = vcmp.eq.s32.totalorder %v2268, 2
      %v2274 = vxor.u32 %v2264, 2147483648
      %v2275 = vsel %vm2273, %v2274, %v2265
      %v2276 = vsel %vm2269, %v2272, %v2275
      %v2277 = vsel %vm2266, nan, %v2276
      %v2278 = vand.u32 2147483647, %v1303
      %vm2279 = vcmp.le.f32.partialorder %v2278, 0.7853982
      %vm2280 = vcmp.lt.s32.totalorder %v1303, 0
      %v2281 = vand.u32 %v1303, 2139095040
      %v2282 = vshrl.u32 %v2281, 23
      %v2283 = vsub.s32 %v2282, 127
      %v2284 = vand.u32 2147483647, %v1303
      %v2285 = vand.u32 %v2284, 8388607
      %v2286 = vor.u32 %v2285, 8388608
      %v2287 = vsub.s32 0, %v2286
      %v2288 = vadd.s32 %v2283, 1
      %vm2289 = vcmp.gt.s32.totalorder %v2288, 0
      %v2290 = vsel %vm2289, %v2288, 0
      %v2291 = vshrl.u32 %v2290, 5
      %v2292 = vand.u32 %v2290, 31
      %v2293 = vsub.s32 32, %v2292
      %v2294 = vshrl.u32 683565275, %v2293
      %v2295 = vshll.u32 683565275, %v2292
      %v2296 = vshrl.u32 2475754826, %v2293
      %v2297 = vor.u32 %v2295, %v2296
      %v2298 = vshll.u32 2475754826, %v2292
      %v2299 = vshrl.u32 2131351028, %v2293
      %v2300 = vor.u32 %v2298, %v2299
      %v2301 = vshll.u32 2131351028, %v2292
      %v2302 = vshrl.u32 2102212464, %v2293
      %v2303 = vor.u32 %v2301, %v2302
      %v2304 = vshll.u32 2102212464, %v2292
      %v2305 = vshrl.u32 920167782, %v2293
      %v2306 = vor.u32 %v2304, %v2305
      %v2307 = vshll.u32 920167782, %v2292
      %v2308 = vshrl.u32 1326507024, %v2293
      %v2309 = vor.u32 %v2307, %v2308
      %vm2310 = vcmp.lt.s32.totalorder %v2291, 1
      %vm2311 = vcmp.lt.s32.totalorder %v2291, 2
      %vm2312 = vcmp.lt.s32.totalorder %v2291, 3
      %vm2313 = vcmp.lt.s32.totalorder %v2291, 4
      %v2314 = vsel %vm2310, %v2294, %v2297
      %v2315 = vsel %vm2313, %v2303, 2102212464
      %v2316 = vsel %vm2312, %v2300, %v2315
      %v2317 = vsel %vm2311, %v2314, %v2316
      %v2318 = vsel %vm2310, %v2297, %v2300
      %v2319 = vsel %vm2313, %v2306, 920167782
      %v2320 = vsel %vm2312, %v2303, %v2319
      %v2321 = vsel %vm2311, %v2318, %v2320
      %v2322 = vsel %vm2310, %v2300, %v2303
      %v2323 = vsel %vm2313, %v2309, 1326507024
      %v2324 = vsel %vm2312, %v2306, %v2323
      %v2325 = vsel %vm2311, %v2322, %v2324
      %v2326 = vshll.u32 %v2286, 8
      %v2327 = vmul.u32.u64.compose %v2326, %v2325
      %v2328 = vextract.low.u32 %v2327
      %v2329 = vextract.high.u32 %v2327
      %v2330 = vmul.u32.u64.compose %v2326, %v2321
      %v2331 = vextract.low.u32 %v2330
      %v2332 = vextract.high.u32 %v2330
      %v2333 = vmul.u32 %v2326, %v2317
      %v2334 = vadd.s32 %v2329, %v2331
      %vm2335 = vc.u32 %v2329, %v2331
      %v2336 = vadd.s32 %v2332, 1
      %v2337 = vsel %vm2335, %v2336, %v2332
      %v2338 = vadd.s32 %v2333, %v2337
      %v2339 = vadd.s32 %v2338, 536870912
      %v2340 = vshrl.u32 %v2339, 30
      %v2341 = vshll.u32 %v2340, 30
      %v2342 = vsub.s32 %v2338, %v2341
      %vm2343 = vcmp.lt.s32.totalorder %v2342, 0
      %v2344 = vsub.s32 0, %v2342
      %v2345 = vsel %vm2343, %v2344, %v2342
      %v2346 = vclz %v2345
      %v2347 = vsub.s32 %v2346, 2
      %vm2348 = vcmp.gt.s32.totalorder 0, %v2347
      %v2349 = vsel %vm2348, 0, %v2347
      %v2350 = vsub.s32 32, %v2349
      %v2351 = vshll.u32 %v2342, %v2349
      %v2352 = vshrl.u32 %v2334, %v2350
      %v2353 = vor.u32 %v2351, %v2352
      %v2354 = vsub.s32 4294967266, %v2349
      %v2355 = vadd.s32 %v2354, 127
      %v2356 = vshll.u32 %v2355, 23
      %v2357 = vor.u32 4788187, %v2356
      %v2358 = vand.u32 2147483647, %v2357
      %v2360 = vcvt.s32.f32 %v2353
      %v2361 = vmul.f32 %v2360, %v2358
      %v2362 = vxor.u32 %v2361, 2147483648
      %v2363 = vsel %vm2280, %v2362, %v2361
      %v2364 = vsub.s32 4, %v2340
      %v2365 = vsel %vm2280, %v2364, %v2340
      %v2366 = vsel %vm2279, %v1303, %v2363
      %v2367 = vsel %vm2279, 0, %v2365
      %v2368 = vcosq.f32.pop %v2366
      %v2369 = vsinq.f32.pop %v2366
      %vm2370 = vweird.f32 %v1303
      %v2371 = vadd.s32 %v2367, 3
      %v2372 = vand.u32 %v2371, 3
      %vm2373 = vcmp.lt.s32.totalorder %v2372, 2
      %vm2374 = vcmp.eq.s32.totalorder %v2372, 0
      %v2375 = vxor.u32 %v2369, 2147483648
      %v2376 = vsel %vm2374, %v2368, %v2375
      %vm2377 = vcmp.eq.s32.totalorder %v2372, 2
      %v2378 = vxor.u32 %v2368, 2147483648
      %v2379 = vsel %vm2377, %v2378, %v2369
      %v2380 = vsel %vm2373, %v2376, %v2379
      %v2381 = vsel %vm2370, nan, %v2380
      %v2382 = vand.u32 2147483647, %v1309
      %vm2383 = vcmp.le.f32.partialorder %v2382, 0.7853982
      %vm2384 = vcmp.lt.s32.totalorder %v1309, 0
      %v2385 = vand.u32 %v1309, 2139095040
      %v2386 = vshrl.u32 %v2385, 23
      %v2387 = vsub.s32 %v2386, 127
      %v2388 = vand.u32 2147483647, %v1309
      %v2389 = vand.u32 %v2388, 8388607
      %v2390 = vor.u32 %v2389, 8388608
      %v2391 = vsub.s32 0, %v2390
      %v2392 = vadd.s32 %v2387, 1
      %vm2393 = vcmp.gt.s32.totalorder %v2392, 0
      %v2394 = vsel %vm2393, %v2392, 0
      %v2395 = vshrl.u32 %v2394, 5
      %v2396 = vand.u32 %v2394, 31
      %v2397 = vsub.s32 32, %v2396
      %v2398 = vshrl.u32 683565275, %v2397
      %v2399 = vshll.u32 683565275, %v2396
      %v2400 = vshrl.u32 2475754826, %v2397
      %v2401 = vor.u32 %v2399, %v2400
      %v2402 = vshll.u32 2475754826, %v2396
      %v2403 = vshrl.u32 2131351028, %v2397
      %v2404 = vor.u32 %v2402, %v2403
      %v2405 = vshll.u32 2131351028, %v2396
      %v2406 = vshrl.u32 2102212464, %v2397
      %v2407 = vor.u32 %v2405, %v2406
      %v2408 = vshll.u32 2102212464, %v2396
      %v2409 = vshrl.u32 920167782, %v2397
      %v2410 = vor.u32 %v2408, %v2409
      %v2411 = vshll.u32 920167782, %v2396
      %v2412 = vshrl.u32 1326507024, %v2397
      %v2413 = vor.u32 %v2411, %v2412
      %vm2414 = vcmp.lt.s32.totalorder %v2395, 1
      %vm2415 = vcmp.lt.s32.totalorder %v2395, 2
      %vm2416 = vcmp.lt.s32.totalorder %v2395, 3
      %vm2417 = vcmp.lt.s32.totalorder %v2395, 4
      %v2418 = vsel %vm2414, %v2398, %v2401
      %v2419 = vsel %vm2417, %v2407, 2102212464
      %v2420 = vsel %vm2416, %v2404, %v2419
      %v2421 = vsel %vm2415, %v2418, %v2420
      %v2422 = vsel %vm2414, %v2401, %v2404
      %v2423 = vsel %vm2417, %v2410, 920167782
      %v2424 = vsel %vm2416, %v2407, %v2423
      %v2425 = vsel %vm2415, %v2422, %v2424
      %v2426 = vsel %vm2414, %v2404, %v2407
      %v2427 = vsel %vm2417, %v2413, 1326507024
      %v2428 = vsel %vm2416, %v2410, %v2427
      %v2429 = vsel %vm2415, %v2426, %v2428
      %v2430 = vshll.u32 %v2390, 8
      %v2431 = vmul.u32.u64.compose %v2430, %v2429
      %v2432 = vextract.low.u32 %v2431
      %v2433 = vextract.high.u32 %v2431
      %v2434 = vmul.u32.u64.compose %v2430, %v2425
      %v2435 = vextract.low.u32 %v2434
      %v2436 = vextract.high.u32 %v2434
      %v2437 = vmul.u32 %v2430, %v2421
      %v2438 = vadd.s32 %v2433, %v2435
      %vm2439 = vc.u32 %v2433, %v2435
      %v2440 = vadd.s32 %v2436, 1
      %v2441 = vsel %vm2439, %v2440, %v2436
      %v2442 = vadd.s32 %v2437, %v2441
      %v2443 = vadd.s32 %v2442, 536870912
      %v2444 = vshrl.u32 %v2443, 30
      %v2445 = vshll.u32 %v2444, 30
      %v2446 = vsub.s32 %v2442, %v2445
      %vm2447 = vcmp.lt.s32.totalorder %v2446, 0
      %v2448 = vsub.s32 0, %v2446
      %v2449 = vsel %vm2447, %v2448, %v2446
      %v2450 = vclz %v2449
      %v2451 = vsub.s32 %v2450, 2
      %vm2452 = vcmp.gt.s32.totalorder 0, %v2451
      %v2453 = vsel %vm2452, 0, %v2451
      %v2454 = vsub.s32 32, %v2453
      %v2455 = vshll.u32 %v2446, %v2453
      %v2456 = vshrl.u32 %v2438, %v2454
      %v2457 = vor.u32 %v2455, %v2456
      %v2458 = vsub.s32 4294967266, %v2453
      %v2459 = vadd.s32 %v2458, 127
      %v2460 = vshll.u32 %v2459, 23
      %v2461 = vor.u32 4788187, %v2460
      %v2462 = vand.u32 2147483647, %v2461
      %v2464 = vcvt.s32.f32 %v2457
      %v2465 = vmul.f32 %v2464, %v2462
      %v2466 = vxor.u32 %v2465, 2147483648
      %v2467 = vsel %vm2384, %v2466, %v2465
      %v2468 = vsub.s32 4, %v2444
      %v2469 = vsel %vm2384, %v2468, %v2444
      %v2470 = vsel %vm2383, %v1309, %v2467
      %v2471 = vsel %vm2383, 0, %v2469
      %v2472 = vcosq.f32.pop %v2470
      %v2473 = vsinq.f32.pop %v2470
      %vm2474 = vweird.f32 %v1309
      %v2475 = vadd.s32 %v2471, 3
      %v2476 = vand.u32 %v2475, 3
      %vm2477 = vcmp.lt.s32.totalorder %v2476, 2
      %vm2478 = vcmp.eq.s32.totalorder %v2476, 0
      %v2479 = vxor.u32 %v2473, 2147483648
      %v2480 = vsel %vm2478, %v2472, %v2479
      %vm2481 = vcmp.eq.s32.totalorder %v2476, 2
      %v2482 = vxor.u32 %v2472, 2147483648
      %v2483 = vsel %vm2481, %v2482, %v2473
      %v2484 = vsel %vm2477, %v2480, %v2483
      %v2485 = vsel %vm2474, nan, %v2484
      %v2486 = vand.u32 2147483647, %v1315
      %vm2487 = vcmp.le.f32.partialorder %v2486, 0.7853982
      %vm2488 = vcmp.lt.s32.totalorder %v1315, 0
      %v2489 = vand.u32 %v1315, 2139095040
      %v2490 = vshrl.u32 %v2489, 23
      %v2491 = vsub.s32 %v2490, 127
      %v2492 = vand.u32 2147483647, %v1315
      %v2493 = vand.u32 %v2492, 8388607
      %v2494 = vor.u32 %v2493, 8388608
      %v2495 = vsub.s32 0, %v2494
      %v2496 = vadd.s32 %v2491, 1
      %vm2497 = vcmp.gt.s32.totalorder %v2496, 0
      %v2498 = vsel %vm2497, %v2496, 0
      %v2499 = vshrl.u32 %v2498, 5
      %v2500 = vand.u32 %v2498, 31
      %v2501 = vsub.s32 32, %v2500
      %v2502 = vshrl.u32 683565275, %v2501
      %v2503 = vshll.u32 683565275, %v2500
      %v2504 = vshrl.u32 2475754826, %v2501
      %v2505 = vor.u32 %v2503, %v2504
      %v2506 = vshll.u32 2475754826, %v2500
      %v2507 = vshrl.u32 2131351028, %v2501
      %v2508 = vor.u32 %v2506, %v2507
      %v2509 = vshll.u32 2131351028, %v2500
      %v2510 = vshrl.u32 2102212464, %v2501
      %v2511 = vor.u32 %v2509, %v2510
      %v2512 = vshll.u32 2102212464, %v2500
      %v2513 = vshrl.u32 920167782, %v2501
      %v2514 = vor.u32 %v2512, %v2513
      %v2515 = vshll.u32 920167782, %v2500
      %v2516 = vshrl.u32 1326507024, %v2501
      %v2517 = vor.u32 %v2515, %v2516
      %vm2518 = vcmp.lt.s32.totalorder %v2499, 1
      %vm2519 = vcmp.lt.s32.totalorder %v2499, 2
      %vm2520 = vcmp.lt.s32.totalorder %v2499, 3
      %vm2521 = vcmp.lt.s32.totalorder %v2499, 4
      %v2522 = vsel %vm2518, %v2502, %v2505
      %v2523 = vsel %vm2521, %v2511, 2102212464
      %v2524 = vsel %vm2520, %v2508, %v2523
      %v2525 = vsel %vm2519, %v2522, %v2524
      %v2526 = vsel %vm2518, %v2505, %v2508
      %v2527 = vsel %vm2521, %v2514, 920167782
      %v2528 = vsel %vm2520, %v2511, %v2527
      %v2529 = vsel %vm2519, %v2526, %v2528
      %v2530 = vsel %vm2518, %v2508, %v2511
      %v2531 = vsel %vm2521, %v2517, 1326507024
      %v2532 = vsel %vm2520, %v2514, %v2531
      %v2533 = vsel %vm2519, %v2530, %v2532
      %v2534 = vshll.u32 %v2494, 8
      %v2535 = vmul.u32.u64.compose %v2534, %v2533
      %v2536 = vextract.low.u32 %v2535
      %v2537 = vextract.high.u32 %v2535
      %v2538 = vmul.u32.u64.compose %v2534, %v2529
      %v2539 = vextract.low.u32 %v2538
      %v2540 = vextract.high.u32 %v2538
      %v2541 = vmul.u32 %v2534, %v2525
      %v2542 = vadd.s32 %v2537, %v2539
      %vm2543 = vc.u32 %v2537, %v2539
      %v2544 = vadd.s32 %v2540, 1
      %v2545 = vsel %vm2543, %v2544, %v2540
      %v2546 = vadd.s32 %v2541, %v2545
      %v2547 = vadd.s32 %v2546, 536870912
      %v2548 = vshrl.u32 %v2547, 30
      %v2549 = vshll.u32 %v2548, 30
      %v2550 = vsub.s32 %v2546, %v2549
      %vm2551 = vcmp.lt.s32.totalorder %v2550, 0
      %v2552 = vsub.s32 0, %v2550
      %v2553 = vsel %vm2551, %v2552, %v2550
      %v2554 = vclz %v2553
      %v2555 = vsub.s32 %v2554, 2
      %vm2556 = vcmp.gt.s32.totalorder 0, %v2555
      %v2557 = vsel %vm2556, 0, %v2555
      %v2558 = vsub.s32 32, %v2557
      %v2559 = vshll.u32 %v2550, %v2557
      %v2560 = vshrl.u32 %v2542, %v2558
      %v2561 = vor.u32 %v2559, %v2560
      %v2562 = vsub.s32 4294967266, %v2557
      %v2563 = vadd.s32 %v2562, 127
      %v2564 = vshll.u32 %v2563, 23
      %v2565 = vor.u32 4788187, %v2564
      %v2566 = vand.u32 2147483647, %v2565
      %v2568 = vcvt.s32.f32 %v2561
      %v2569 = vmul.f32 %v2568, %v2566
      %v2570 = vxor.u32 %v2569, 2147483648
      %v2571 = vsel %vm2488, %v2570, %v2569
      %v2572 = vsub.s32 4, %v2548
      %v2573 = vsel %vm2488, %v2572, %v2548
      %v2574 = vsel %vm2487, %v1315, %v2571
      %v2575 = vsel %vm2487, 0, %v2573
      %v2576 = vcosq.f32.pop %v2574
      %v2577 = vsinq.f32.pop %v2574
      %vm2578 = vweird.f32 %v1315
      %v2579 = vadd.s32 %v2575, 3
      %v2580 = vand.u32 %v2579, 3
      %vm2581 = vcmp.lt.s32.totalorder %v2580, 2
      %vm2582 = vcmp.eq.s32.totalorder %v2580, 0
      %v2583 = vxor.u32 %v2577, 2147483648
      %v2584 = vsel %vm2582, %v2576, %v2583
      %vm2585 = vcmp.eq.s32.totalorder %v2580, 2
      %v2586 = vxor.u32 %v2576, 2147483648
      %v2587 = vsel %vm2585, %v2586, %v2577
      %v2588 = vsel %vm2581, %v2584, %v2587
      %v2589 = vsel %vm2578, nan, %v2588
      %v2590 = vand.u32 2147483647, %v1321
      %vm2591 = vcmp.le.f32.partialorder %v2590, 0.7853982
      %vm2592 = vcmp.lt.s32.totalorder %v1321, 0
      %v2593 = vand.u32 %v1321, 2139095040
      %v2594 = vshrl.u32 %v2593, 23
      %v2595 = vsub.s32 %v2594, 127
      %v2596 = vand.u32 2147483647, %v1321
      %v2597 = vand.u32 %v2596, 8388607
      %v2598 = vor.u32 %v2597, 8388608
      %v2599 = vsub.s32 0, %v2598
      %v2600 = vadd.s32 %v2595, 1
      %vm2601 = vcmp.gt.s32.totalorder %v2600, 0
      %v2602 = vsel %vm2601, %v2600, 0
      %v2603 = vshrl.u32 %v2602, 5
      %v2604 = vand.u32 %v2602, 31
      %v2605 = vsub.s32 32, %v2604
      %v2606 = vshrl.u32 683565275, %v2605
      %v2607 = vshll.u32 683565275, %v2604
      %v2608 = vshrl.u32 2475754826, %v2605
      %v2609 = vor.u32 %v2607, %v2608
      %v2610 = vshll.u32 2475754826, %v2604
      %v2611 = vshrl.u32 2131351028, %v2605
      %v2612 = vor.u32 %v2610, %v2611
      %v2613 = vshll.u32 2131351028, %v2604
      %v2614 = vshrl.u32 2102212464, %v2605
      %v2615 = vor.u32 %v2613, %v2614
      %v2616 = vshll.u32 2102212464, %v2604
      %v2617 = vshrl.u32 920167782, %v2605
      %v2618 = vor.u32 %v2616, %v2617
      %v2619 = vshll.u32 920167782, %v2604
      %v2620 = vshrl.u32 1326507024, %v2605
      %v2621 = vor.u32 %v2619, %v2620
      %vm2622 = vcmp.lt.s32.totalorder %v2603, 1
      %vm2623 = vcmp.lt.s32.totalorder %v2603, 2
      %vm2624 = vcmp.lt.s32.totalorder %v2603, 3
      %vm2625 = vcmp.lt.s32.totalorder %v2603, 4
      %v2626 = vsel %vm2622, %v2606, %v2609
      %v2627 = vsel %vm2625, %v2615, 2102212464
      %v2628 = vsel %vm2624, %v2612, %v2627
      %v2629 = vsel %vm2623, %v2626, %v2628
      %v2630 = vsel %vm2622, %v2609, %v2612
      %v2631 = vsel %vm2625, %v2618, 920167782
      %v2632 = vsel %vm2624, %v2615, %v2631
      %v2633 = vsel %vm2623, %v2630, %v2632
      %v2634 = vsel %vm2622, %v2612, %v2615
      %v2635 = vsel %vm2625, %v2621, 1326507024
      %v2636 = vsel %vm2624, %v2618, %v2635
      %v2637 = vsel %vm2623, %v2634, %v2636
      %v2638 = vshll.u32 %v2598, 8
      %v2639 = vmul.u32.u64.compose %v2638, %v2637
      %v2640 = vextract.low.u32 %v2639
      %v2641 = vextract.high.u32 %v2639
      %v2642 = vmul.u32.u64.compose %v2638, %v2633
      %v2643 = vextract.low.u32 %v2642
      %v2644 = vextract.high.u32 %v2642
      %v2645 = vmul.u32 %v2638, %v2629
      %v2646 = vadd.s32 %v2641, %v2643
      %vm2647 = vc.u32 %v2641, %v2643
      %v2648 = vadd.s32 %v2644, 1
      %v2649 = vsel %vm2647, %v2648, %v2644
      %v2650 = vadd.s32 %v2645, %v2649
      %v2651 = vadd.s32 %v2650, 536870912
      %v2652 = vshrl.u32 %v2651, 30
      %v2653 = vshll.u32 %v2652, 30
      %v2654 = vsub.s32 %v2650, %v2653
      %vm2655 = vcmp.lt.s32.totalorder %v2654, 0
      %v2656 = vsub.s32 0, %v2654
      %v2657 = vsel %vm2655, %v2656, %v2654
      %v2658 = vclz %v2657
      %v2659 = vsub.s32 %v2658, 2
      %vm2660 = vcmp.gt.s32.totalorder 0, %v2659
      %v2661 = vsel %vm2660, 0, %v2659
      %v2662 = vsub.s32 32, %v2661
      %v2663 = vshll.u32 %v2654, %v2661
      %v2664 = vshrl.u32 %v2646, %v2662
      %v2665 = vor.u32 %v2663, %v2664
      %v2666 = vsub.s32 4294967266, %v2661
      %v2667 = vadd.s32 %v2666, 127
      %v2668 = vshll.u32 %v2667, 23
      %v2669 = vor.u32 4788187, %v2668
      %v2670 = vand.u32 2147483647, %v2669
      %v2672 = vcvt.s32.f32 %v2665
      %v2673 = vmul.f32 %v2672, %v2670
      %v2674 = vxor.u32 %v2673, 2147483648
      %v2675 = vsel %vm2592, %v2674, %v2673
      %v2676 = vsub.s32 4, %v2652
      %v2677 = vsel %vm2592, %v2676, %v2652
      %v2678 = vsel %vm2591, %v1321, %v2675
      %v2679 = vsel %vm2591, 0, %v2677
      %v2680 = vcosq.f32.pop %v2678
      %v2681 = vsinq.f32.pop %v2678
      %vm2682 = vweird.f32 %v1321
      %v2683 = vadd.s32 %v2679, 3
      %v2684 = vand.u32 %v2683, 3
      %vm2685 = vcmp.lt.s32.totalorder %v2684, 2
      %vm2686 = vcmp.eq.s32.totalorder %v2684, 0
      %v2687 = vxor.u32 %v2681, 2147483648
      %v2688 = vsel %vm2686, %v2680, %v2687
      %vm2689 = vcmp.eq.s32.totalorder %v2684, 2
      %v2690 = vxor.u32 %v2680, 2147483648
      %v2691 = vsel %vm2689, %v2690, %v2681
      %v2692 = vsel %vm2685, %v2688, %v2691
      %v2693 = vsel %vm2682, nan, %v2692
      %v2694 = vand.u32 2147483647, %v1327
      %vm2695 = vcmp.le.f32.partialorder %v2694, 0.7853982
      %vm2696 = vcmp.lt.s32.totalorder %v1327, 0
      %v2697 = vand.u32 %v1327, 2139095040
      %v2698 = vshrl.u32 %v2697, 23
      %v2699 = vsub.s32 %v2698, 127
      %v2700 = vand.u32 2147483647, %v1327
      %v2701 = vand.u32 %v2700, 8388607
      %v2702 = vor.u32 %v2701, 8388608
      %v2703 = vsub.s32 0, %v2702
      %v2704 = vadd.s32 %v2699, 1
      %vm2705 = vcmp.gt.s32.totalorder %v2704, 0
      %v2706 = vsel %vm2705, %v2704, 0
      %v2707 = vshrl.u32 %v2706, 5
      %v2708 = vand.u32 %v2706, 31
      %v2709 = vsub.s32 32, %v2708
      %v2710 = vshrl.u32 683565275, %v2709
      %v2711 = vshll.u32 683565275, %v2708
      %v2712 = vshrl.u32 2475754826, %v2709
      %v2713 = vor.u32 %v2711, %v2712
      %v2714 = vshll.u32 2475754826, %v2708
      %v2715 = vshrl.u32 2131351028, %v2709
      %v2716 = vor.u32 %v2714, %v2715
      %v2717 = vshll.u32 2131351028, %v2708
      %v2718 = vshrl.u32 2102212464, %v2709
      %v2719 = vor.u32 %v2717, %v2718
      %v2720 = vshll.u32 2102212464, %v2708
      %v2721 = vshrl.u32 920167782, %v2709
      %v2722 = vor.u32 %v2720, %v2721
      %v2723 = vshll.u32 920167782, %v2708
      %v2724 = vshrl.u32 1326507024, %v2709
      %v2725 = vor.u32 %v2723, %v2724
      %vm2726 = vcmp.lt.s32.totalorder %v2707, 1
      %vm2727 = vcmp.lt.s32.totalorder %v2707, 2
      %vm2728 = vcmp.lt.s32.totalorder %v2707, 3
      %vm2729 = vcmp.lt.s32.totalorder %v2707, 4
      %v2730 = vsel %vm2726, %v2710, %v2713
      %v2731 = vsel %vm2729, %v2719, 2102212464
      %v2732 = vsel %vm2728, %v2716, %v2731
      %v2733 = vsel %vm2727, %v2730, %v2732
      %v2734 = vsel %vm2726, %v2713, %v2716
      %v2735 = vsel %vm2729, %v2722, 920167782
      %v2736 = vsel %vm2728, %v2719, %v2735
      %v2737 = vsel %vm2727, %v2734, %v2736
      %v2738 = vsel %vm2726, %v2716, %v2719
      %v2739 = vsel %vm2729, %v2725, 1326507024
      %v2740 = vsel %vm2728, %v2722, %v2739
      %v2741 = vsel %vm2727, %v2738, %v2740
      %v2742 = vshll.u32 %v2702, 8
      %v2743 = vmul.u32.u64.compose %v2742, %v2741
      %v2744 = vextract.low.u32 %v2743
      %v2745 = vextract.high.u32 %v2743
      %v2746 = vmul.u32.u64.compose %v2742, %v2737
      %v2747 = vextract.low.u32 %v2746
      %v2748 = vextract.high.u32 %v2746
      %v2749 = vmul.u32 %v2742, %v2733
      %v2750 = vadd.s32 %v2745, %v2747
      %vm2751 = vc.u32 %v2745, %v2747
      %v2752 = vadd.s32 %v2748, 1
      %v2753 = vsel %vm2751, %v2752, %v2748
      %v2754 = vadd.s32 %v2749, %v2753
      %v2755 = vadd.s32 %v2754, 536870912
      %v2756 = vshrl.u32 %v2755, 30
      %v2757 = vshll.u32 %v2756, 30
      %v2758 = vsub.s32 %v2754, %v2757
      %vm2759 = vcmp.lt.s32.totalorder %v2758, 0
      %v2760 = vsub.s32 0, %v2758
      %v2761 = vsel %vm2759, %v2760, %v2758
      %v2762 = vclz %v2761
      %v2763 = vsub.s32 %v2762, 2
      %vm2764 = vcmp.gt.s32.totalorder 0, %v2763
      %v2765 = vsel %vm2764, 0, %v2763
      %v2766 = vsub.s32 32, %v2765
      %v2767 = vshll.u32 %v2758, %v2765
      %v2768 = vshrl.u32 %v2750, %v2766
      %v2769 = vor.u32 %v2767, %v2768
      %v2770 = vsub.s32 4294967266, %v2765
      %v2771 = vadd.s32 %v2770, 127
      %v2772 = vshll.u32 %v2771, 23
      %v2773 = vor.u32 4788187, %v2772
      %v2774 = vand.u32 2147483647, %v2773
      %v2776 = vcvt.s32.f32 %v2769
      %v2777 = vmul.f32 %v2776, %v2774
      %v2778 = vxor.u32 %v2777, 2147483648
      %v2779 = vsel %vm2696, %v2778, %v2777
      %v2780 = vsub.s32 4, %v2756
      %v2781 = vsel %vm2696, %v2780, %v2756
      %v2782 = vsel %vm2695, %v1327, %v2779
      %v2783 = vsel %vm2695, 0, %v2781
      %v2784 = vcosq.f32.pop %v2782
      %v2785 = vsinq.f32.pop %v2782
      %vm2786 = vweird.f32 %v1327
      %v2787 = vadd.s32 %v2783, 3
      %v2788 = vand.u32 %v2787, 3
      %vm2789 = vcmp.lt.s32.totalorder %v2788, 2
      %vm2790 = vcmp.eq.s32.totalorder %v2788, 0
      %v2791 = vxor.u32 %v2785, 2147483648
      %v2792 = vsel %vm2790, %v2784, %v2791
      %vm2793 = vcmp.eq.s32.totalorder %v2788, 2
      %v2794 = vxor.u32 %v2784, 2147483648
      %v2795 = vsel %vm2793, %v2794, %v2785
      %v2796 = vsel %vm2789, %v2792, %v2795
      %v2797 = vsel %vm2786, nan, %v2796
      %v2798 = vand.u32 2147483647, %v1333
      %vm2799 = vcmp.le.f32.partialorder %v2798, 0.7853982
      %vm2800 = vcmp.lt.s32.totalorder %v1333, 0
      %v2801 = vand.u32 %v1333, 2139095040
      %v2802 = vshrl.u32 %v2801, 23
      %v2803 = vsub.s32 %v2802, 127
      %v2804 = vand.u32 2147483647, %v1333
      %v2805 = vand.u32 %v2804, 8388607
      %v2806 = vor.u32 %v2805, 8388608
      %v2807 = vsub.s32 0, %v2806
      %v2808 = vadd.s32 %v2803, 1
      %vm2809 = vcmp.gt.s32.totalorder %v2808, 0
      %v2810 = vsel %vm2809, %v2808, 0
      %v2811 = vshrl.u32 %v2810, 5
      %v2812 = vand.u32 %v2810, 31
      %v2813 = vsub.s32 32, %v2812
      %v2814 = vshrl.u32 683565275, %v2813
      %v2815 = vshll.u32 683565275, %v2812
      %v2816 = vshrl.u32 2475754826, %v2813
      %v2817 = vor.u32 %v2815, %v2816
      %v2818 = vshll.u32 2475754826, %v2812
      %v2819 = vshrl.u32 2131351028, %v2813
      %v2820 = vor.u32 %v2818, %v2819
      %v2821 = vshll.u32 2131351028, %v2812
      %v2822 = vshrl.u32 2102212464, %v2813
      %v2823 = vor.u32 %v2821, %v2822
      %v2824 = vshll.u32 2102212464, %v2812
      %v2825 = vshrl.u32 920167782, %v2813
      %v2826 = vor.u32 %v2824, %v2825
      %v2827 = vshll.u32 920167782, %v2812
      %v2828 = vshrl.u32 1326507024, %v2813
      %v2829 = vor.u32 %v2827, %v2828
      %vm2830 = vcmp.lt.s32.totalorder %v2811, 1
      %vm2831 = vcmp.lt.s32.totalorder %v2811, 2
      %vm2832 = vcmp.lt.s32.totalorder %v2811, 3
      %vm2833 = vcmp.lt.s32.totalorder %v2811, 4
      %v2834 = vsel %vm2830, %v2814, %v2817
      %v2835 = vsel %vm2833, %v2823, 2102212464
      %v2836 = vsel %vm2832, %v2820, %v2835
      %v2837 = vsel %vm2831, %v2834, %v2836
      %v2838 = vsel %vm2830, %v2817, %v2820
      %v2839 = vsel %vm2833, %v2826, 920167782
      %v2840 = vsel %vm2832, %v2823, %v2839
      %v2841 = vsel %vm2831, %v2838, %v2840
      %v2842 = vsel %vm2830, %v2820, %v2823
      %v2843 = vsel %vm2833, %v2829, 1326507024
      %v2844 = vsel %vm2832, %v2826, %v2843
      %v2845 = vsel %vm2831, %v2842, %v2844
      %v2846 = vshll.u32 %v2806, 8
      %v2847 = vmul.u32.u64.compose %v2846, %v2845
      %v2848 = vextract.low.u32 %v2847
      %v2849 = vextract.high.u32 %v2847
      %v2850 = vmul.u32.u64.compose %v2846, %v2841
      %v2851 = vextract.low.u32 %v2850
      %v2852 = vextract.high.u32 %v2850
      %v2853 = vmul.u32 %v2846, %v2837
      %v2854 = vadd.s32 %v2849, %v2851
      %vm2855 = vc.u32 %v2849, %v2851
      %v2856 = vadd.s32 %v2852, 1
      %v2857 = vsel %vm2855, %v2856, %v2852
      %v2858 = vadd.s32 %v2853, %v2857
      %v2859 = vadd.s32 %v2858, 536870912
      %v2860 = vshrl.u32 %v2859, 30
      %v2861 = vshll.u32 %v2860, 30
      %v2862 = vsub.s32 %v2858, %v2861
      %vm2863 = vcmp.lt.s32.totalorder %v2862, 0
      %v2864 = vsub.s32 0, %v2862
      %v2865 = vsel %vm2863, %v2864, %v2862
      %v2866 = vclz %v2865
      %v2867 = vsub.s32 %v2866, 2
      %vm2868 = vcmp.gt.s32.totalorder 0, %v2867
      %v2869 = vsel %vm2868, 0, %v2867
      %v2870 = vsub.s32 32, %v2869
      %v2871 = vshll.u32 %v2862, %v2869
      %v2872 = vshrl.u32 %v2854, %v2870
      %v2873 = vor.u32 %v2871, %v2872
      %v2874 = vsub.s32 4294967266, %v2869
      %v2875 = vadd.s32 %v2874, 127
      %v2876 = vshll.u32 %v2875, 23
      %v2877 = vor.u32 4788187, %v2876
      %v2878 = vand.u32 2147483647, %v2877
      %v2880 = vcvt.s32.f32 %v2873
      %v2881 = vmul.f32 %v2880, %v2878
      %v2882 = vxor.u32 %v2881, 2147483648
      %v2883 = vsel %vm2800, %v2882, %v2881
      %v2884 = vsub.s32 4, %v2860
      %v2885 = vsel %vm2800, %v2884, %v2860
      %v2886 = vsel %vm2799, %v1333, %v2883
      %v2887 = vsel %vm2799, 0, %v2885
      %v2888 = vcosq.f32.pop %v2886
      %v2889 = vsinq.f32.pop %v2886
      %vm2890 = vweird.f32 %v1333
      %v2891 = vadd.s32 %v2887, 3
      %v2892 = vand.u32 %v2891, 3
      %vm2893 = vcmp.lt.s32.totalorder %v2892, 2
      %vm2894 = vcmp.eq.s32.totalorder %v2892, 0
      %v2895 = vxor.u32 %v2889, 2147483648
      %v2896 = vsel %vm2894, %v2888, %v2895
      %vm2897 = vcmp.eq.s32.totalorder %v2892, 2
      %v2898 = vxor.u32 %v2888, 2147483648
      %v2899 = vsel %vm2897, %v2898, %v2889
      %v2900 = vsel %vm2893, %v2896, %v2899
      %v2901 = vsel %vm2890, nan, %v2900
      %v2902 = vand.u32 2147483647, %v1339
      %vm2903 = vcmp.le.f32.partialorder %v2902, 0.7853982
      %vm2904 = vcmp.lt.s32.totalorder %v1339, 0
      %v2905 = vand.u32 %v1339, 2139095040
      %v2906 = vshrl.u32 %v2905, 23
      %v2907 = vsub.s32 %v2906, 127
      %v2908 = vand.u32 2147483647, %v1339
      %v2909 = vand.u32 %v2908, 8388607
      %v2910 = vor.u32 %v2909, 8388608
      %v2911 = vsub.s32 0, %v2910
      %v2912 = vadd.s32 %v2907, 1
      %vm2913 = vcmp.gt.s32.totalorder %v2912, 0
      %v2914 = vsel %vm2913, %v2912, 0
      %v2915 = vshrl.u32 %v2914, 5
      %v2916 = vand.u32 %v2914, 31
      %v2917 = vsub.s32 32, %v2916
      %v2918 = vshrl.u32 683565275, %v2917
      %v2919 = vshll.u32 683565275, %v2916
      %v2920 = vshrl.u32 2475754826, %v2917
      %v2921 = vor.u32 %v2919, %v2920
      %v2922 = vshll.u32 2475754826, %v2916
      %v2923 = vshrl.u32 2131351028, %v2917
      %v2924 = vor.u32 %v2922, %v2923
      %v2925 = vshll.u32 2131351028, %v2916
      %v2926 = vshrl.u32 2102212464, %v2917
      %v2927 = vor.u32 %v2925, %v2926
      %v2928 = vshll.u32 2102212464, %v2916
      %v2929 = vshrl.u32 920167782, %v2917
      %v2930 = vor.u32 %v2928, %v2929
      %v2931 = vshll.u32 920167782, %v2916
      %v2932 = vshrl.u32 1326507024, %v2917
      %v2933 = vor.u32 %v2931, %v2932
      %vm2934 = vcmp.lt.s32.totalorder %v2915, 1
      %vm2935 = vcmp.lt.s32.totalorder %v2915, 2
      %vm2936 = vcmp.lt.s32.totalorder %v2915, 3
      %vm2937 = vcmp.lt.s32.totalorder %v2915, 4
      %v2938 = vsel %vm2934, %v2918, %v2921
      %v2939 = vsel %vm2937, %v2927, 2102212464
      %v2940 = vsel %vm2936, %v2924, %v2939
      %v2941 = vsel %vm2935, %v2938, %v2940
      %v2942 = vsel %vm2934, %v2921, %v2924
      %v2943 = vsel %vm2937, %v2930, 920167782
      %v2944 = vsel %vm2936, %v2927, %v2943
      %v2945 = vsel %vm2935, %v2942, %v2944
      %v2946 = vsel %vm2934, %v2924, %v2927
      %v2947 = vsel %vm2937, %v2933, 1326507024
      %v2948 = vsel %vm2936, %v2930, %v2947
      %v2949 = vsel %vm2935, %v2946, %v2948
      %v2950 = vshll.u32 %v2910, 8
      %v2951 = vmul.u32.u64.compose %v2950, %v2949
      %v2952 = vextract.low.u32 %v2951
      %v2953 = vextract.high.u32 %v2951
      %v2954 = vmul.u32.u64.compose %v2950, %v2945
      %v2955 = vextract.low.u32 %v2954
      %v2956 = vextract.high.u32 %v2954
      %v2957 = vmul.u32 %v2950, %v2941
      %v2958 = vadd.s32 %v2953, %v2955
      %vm2959 = vc.u32 %v2953, %v2955
      %v2960 = vadd.s32 %v2956, 1
      %v2961 = vsel %vm2959, %v2960, %v2956
      %v2962 = vadd.s32 %v2957, %v2961
      %v2963 = vadd.s32 %v2962, 536870912
      %v2964 = vshrl.u32 %v2963, 30
      %v2965 = vshll.u32 %v2964, 30
      %v2966 = vsub.s32 %v2962, %v2965
      %vm2967 = vcmp.lt.s32.totalorder %v2966, 0
      %v2968 = vsub.s32 0, %v2966
      %v2969 = vsel %vm2967, %v2968, %v2966
      %v2970 = vclz %v2969
      %v2971 = vsub.s32 %v2970, 2
      %vm2972 = vcmp.gt.s32.totalorder 0, %v2971
      %v2973 = vsel %vm2972, 0, %v2971
      %v2974 = vsub.s32 32, %v2973
      %v2975 = vshll.u32 %v2966, %v2973
      %v2976 = vshrl.u32 %v2958, %v2974
      %v2977 = vor.u32 %v2975, %v2976
      %v2978 = vsub.s32 4294967266, %v2973
      %v2979 = vadd.s32 %v2978, 127
      %v2980 = vshll.u32 %v2979, 23
      %v2981 = vor.u32 4788187, %v2980
      %v2982 = vand.u32 2147483647, %v2981
      %v2984 = vcvt.s32.f32 %v2977
      %v2985 = vmul.f32 %v2984, %v2982
      %v2986 = vxor.u32 %v2985, 2147483648
      %v2987 = vsel %vm2904, %v2986, %v2985
      %v2988 = vsub.s32 4, %v2964
      %v2989 = vsel %vm2904, %v2988, %v2964
      %v2990 = vsel %vm2903, %v1339, %v2987
      %v2991 = vsel %vm2903, 0, %v2989
      %v2992 = vcosq.f32.pop %v2990
      %v2993 = vsinq.f32.pop %v2990
      %vm2994 = vweird.f32 %v1339
      %v2995 = vadd.s32 %v2991, 3
      %v2996 = vand.u32 %v2995, 3
      %vm2997 = vcmp.lt.s32.totalorder %v2996, 2
      %vm2998 = vcmp.eq.s32.totalorder %v2996, 0
      %v2999 = vxor.u32 %v2993, 2147483648
      %v3000 = vsel %vm2998, %v2992, %v2999
      %vm3001 = vcmp.eq.s32.totalorder %v2996, 2
      %v3002 = vxor.u32 %v2992, 2147483648
      %v3003 = vsel %vm3001, %v3002, %v2993
      %v3004 = vsel %vm2997, %v3000, %v3003
      %v3005 = vsel %vm2994, nan, %v3004
      %3006 = vst.msk [vmem:[%s172] sm:$0xff] %vm198, %v174
      %3007 = vst.msk [vmem:[%s172 + $0x8] sm:$0xff] %vm198, %v175
      %3008 = vst.msk [vmem:[%s172 + $0x10] sm:$0xff] %vm198, %v176
      %3009 = vst.msk [vmem:[%s172 + $0x18] sm:$0xff] %vm198, %v177
      %3010 = vst.msk [vmem:[%s172 + $0x20] sm:$0xff] %vm198, %v178
      %3011 = vst.msk [vmem:[%s172 + $0x28] sm:$0xff] %vm198, %v179
      %3012 = vst.msk [vmem:[%s172 + $0x30] sm:$0xff] %vm198, %v180
      %3013 = vst.msk [vmem:[%s172 + $0x38] sm:$0xff] %vm198, %v181
      %3014 = vst.msk [vmem:[%s172 + $0x40] sm:$0xff] %vm198, %v182
      %3015 = vst.msk [vmem:[%s172 + $0x48] sm:$0xff] %vm198, %v183
      %3016 = vst.msk [vmem:[%s172 + $0x50] sm:$0xff] %vm198, %v184
      %3017 = vst.msk [vmem:[%s172 + $0x58] sm:$0xff] %vm198, %v185
      %3018 = vst.msk [vmem:[%s172 + $0x60] sm:$0xff] %vm198, %v186
      %3019 = vst.msk [vmem:[%s172 + $0x68] sm:$0xff] %vm198, %v187
      %3020 = vst.msk [vmem:[%s172 + $0x70] sm:$0xff] %vm198, %v188
      %3021 = vst.msk [vmem:[%s172 + $0x78] sm:$0xff] %vm198, %v189
      %3038 = vrot.lane.b32.xlu0 %v1445, 3
      %v3039 = vpop.permute.xlu0 %3038
      %3040 = vrot.lane.b32.xlu0 %v1549, 3
      %v3041 = vpop.permute.xlu0 %3040
      %3042 = vrot.lane.b32.xlu0 %v1653, 3
      %v3043 = vpop.permute.xlu0 %3042
      %3044 = vrot.lane.b32.xlu0 %v1757, 3
      %v3045 = vpop.permute.xlu0 %3044
      %3046 = vrot.lane.b32.xlu0 %v1861, 3
      %v3047 = vpop.permute.xlu0 %3046
      %3048 = vrot.lane.b32.xlu0 %v1965, 3
      %v3049 = vpop.permute.xlu0 %3048
      %3050 = vrot.lane.b32.xlu0 %v2069, 3
      %v3051 = vpop.permute.xlu0 %3050
      %3052 = vrot.lane.b32.xlu0 %v2173, 3
      %v3053 = vpop.permute.xlu0 %3052
      %3054 = vrot.lane.b32.xlu0 %v2277, 3
      %v3055 = vpop.permute.xlu0 %3054
      %3056 = vrot.lane.b32.xlu0 %v2381, 3
      %v3057 = vpop.permute.xlu0 %3056
      %3058 = vrot.lane.b32.xlu0 %v2485, 3
      %v3059 = vpop.permute.xlu0 %3058
      %3060 = vrot.lane.b32.xlu0 %v2589, 3
      %v3061 = vpop.permute.xlu0 %3060
      %3062 = vrot.lane.b32.xlu0 %v2693, 3
      %v3063 = vpop.permute.xlu0 %3062
      %3064 = vrot.lane.b32.xlu0 %v2797, 3
      %v3065 = vpop.permute.xlu0 %3064
      %3066 = vrot.lane.b32.xlu0 %v2901, 3
      %v3067 = vpop.permute.xlu0 %3066
      %3068 = vrot.lane.b32.xlu0 %v3005, 3
      %v3069 = vpop.permute.xlu0 %3068
      %vm3086 = vcmask 318488
      %3087 = vst.msk [vmem:[%s172] sm:$0xff] %vm3086, %v3039
      %3088 = vst.msk [vmem:[%s172 + $0x8] sm:$0xff] %vm3086, %v3041
      %3089 = vst.msk [vmem:[%s172 + $0x10] sm:$0xff] %vm3086, %v3043
      %3090 = vst.msk [vmem:[%s172 + $0x18] sm:$0xff] %vm3086, %v3045
      %3091 = vst.msk [vmem:[%s172 + $0x20] sm:$0xff] %vm3086, %v3047
      %3092 = vst.msk [vmem:[%s172 + $0x28] sm:$0xff] %vm3086, %v3049
      %3093 = vst.msk [vmem:[%s172 + $0x30] sm:$0xff] %vm3086, %v3051
      %3094 = vst.msk [vmem:[%s172 + $0x38] sm:$0xff] %vm3086, %v3053
      %3095 = vst.msk [vmem:[%s172 + $0x40] sm:$0xff] %vm3086, %v3055
      %3096 = vst.msk [vmem:[%s172 + $0x48] sm:$0xff] %vm3086, %v3057
      %3097 = vst.msk [vmem:[%s172 + $0x50] sm:$0xff] %vm3086, %v3059
      %3098 = vst.msk [vmem:[%s172 + $0x58] sm:$0xff] %vm3086, %v3061
      %3099 = vst.msk [vmem:[%s172 + $0x60] sm:$0xff] %vm3086, %v3063
      %3100 = vst.msk [vmem:[%s172 + $0x68] sm:$0xff] %vm3086, %v3065
      %3101 = vst.msk [vmem:[%s172 + $0x70] sm:$0xff] %vm3086, %v3067
      %3102 = vst.msk [vmem:[%s172 + $0x78] sm:$0xff] %vm3086, %v3069
      %s3103 = smul.u32 16, %s14
      %p3104 = scmp.lt.s32.totalorder %s3103, 47
      %s3105 = scalar_select %p3104, %s3103, 47
      %s3106 = smul.addr %s3105, 8
      %s3107 = scalar_lea.vmem %s3, %s3106
      // Predicated region
      $region33: #{positional_encoding.1} parent=31 // pred_check
        %p3108 = pneg %p100
      $region34: #{positional_encoding.1} parent=31 // pred_check_branch
        %3110 = sbr.rel (%p3108) target = $region36
      $region35: #{positional_encoding.1} parent=31 // pred_region
        %s3111 = smul.u32 16, %s14
      $region36: #{positional_encoding.1} parent=31 // pred_fallthru
        _
    $region32: #{positional_encoding.1} parent=5 // pred_fallthru
      _
    %p3112 = scmp.le.s32.totalorder 2, %s9
    // Predicated region
    $region37: #{positional_encoding.1} parent=5 // pred_check
      %p3113 = pneg %p3112
    $region38: #{positional_encoding.1} parent=5 // pred_check_branch
      %3115 = sbr.rel (%p3113) target = $region40
    $region39: #{positional_encoding.1} parent=5 // pred_region
      %s3116 = ssub.s32 %s9, 2
      // Predicated region
      $region41: #{positional_encoding.1} parent=39 // pred_check
        %p3117 = pneg %p106
      $region42: #{positional_encoding.1} parent=39 // pred_check_branch
        %3119 = sbr.rel (%p3117) target = $region44
      $region43: #{positional_encoding.1} parent=39 // pred_region
        %s3120 = smul.u32 16, %s15
        %p3121 = scmp.lt.s32.totalorder %s3120, 47
        %s3122 = scalar_select %p3121, %s3120, 47
        %s3123 = smul.addr %s3122, 8
        %s3124 = scalar_lea.vmem %s3, %s3123
      $region44: #{positional_encoding.1} parent=39 // pred_fallthru
        _
    $region40: #{positional_encoding.1} parent=5 // pred_fallthru
      _
  $region6: #{positional_encoding.1} parent=0 // loop_footer
    %s13 = sadd.s32 1, %s9
  $region7: #{positional_encoding.1} parent=0 // loop_footer_branch
    %8 = sbr.rel target = $region3
  $region8: #{positional_encoding.1} parent=0 // loop_exit
    _

</llo_original>
